<compile_context>
chip_gen: v7x
topology: tpu7x:2x2x1
jax: 0.10.0
libtpu: 0.0.40
codegen_flags: <defaults>
</compile_context>

<pallas_src>
import jax
import jax.numpy as jnp
from jax import lax
from jax.experimental import pallas as pl
from jax.experimental.pallas import tpu as pltpu


# --------------------------------------------------------------------------- #
# Sizing helpers
# --------------------------------------------------------------------------- #
def _vmem_capacity_bytes() -> int:
    """Physical VMEM per core; conservative 64 MiB (v7x) fallback."""
    try:
        info = pltpu.get_tpu_info()
        cap = getattr(info, "vmem_capacity_bytes", None)
        if cap:
            return int(cap)
    except Exception:
        pass
    return 64 * 1024 * 1024


def _pick_batch_block(batch: int, d_state: int, lanes: int = 128) -> int:
    """Largest divisor of `batch` with tb * d_state <= 128 lanes, preferring to
    keep >= 2 batch blocks so v7x's two TensorCores both get work."""
    max_tb = max(1, lanes // max(d_state, 1))
    divs = [t for t in range(1, min(batch, max_tb) + 1) if batch % t == 0]
    pref = [t for t in divs if batch // t >= 2]
    return max(pref) if pref else max(divs)


def _pick_seq_chunk(seq_len: int, bytes_per_row: int, vmem_budget: int,
                    max_chunk: int = 512) -> int:
    """Largest seq chunk (multiple of 8 dividing seq_len, or seq_len itself)
    whose per-chunk VMEM footprint stays within the budget."""
    limit = max(8, min(max_chunk, vmem_budget // max(bytes_per_row, 1)))
    if seq_len <= limit:
        return seq_len
    best = 0
    c = 8
    while c <= min(seq_len - 1, limit):
        if seq_len % c == 0:
            best = c
        c += 8
    if best:
        return best
    return seq_len  # no suitable divisor; fall back to the whole sequence


# --------------------------------------------------------------------------- #
# Kernel
# --------------------------------------------------------------------------- #
def _make_kernel(tb: int, tl: int, d_state: int, cdt):
    ds = d_state
    ib = 8                                    # sublane-tile block of the scan
    n_full, rem = tl // ib, tl % ib
    if n_full <= 4:
        unroll = True
    elif n_full % 4 == 0:
        unroll = 4
    elif n_full % 2 == 0:
        unroll = 2
    else:
        unroll = 1

    def kernel(x_ref, wt_ref, bt_ref, wb_ref, bb_ref, a_ref,
               wco_ref, wdo_ref, bf_ref,
               y_ref, h_ref, aexp_ref, bx_ref, hs_ref):
        # Reset the lane-packed carried state at the first seq chunk.
        @pl.when(pl.program_id(1) == 0)
        def _():
            h_ref[...] = jnp.zeros_like(h_ref)

        # ---- stage 1: per batch row, delta / exp(A*delta) / B_proj(x) packed
        #      along lanes, plus the scan-independent skip matmul (issued
        #      before the serial recurrence so it never waits on it).
        for b in range(tb):
            xb = x_ref[b]                                          # (tl, D), native dtype
            logit = jnp.dot(xb, wt_ref[...],                       # time_proj on the MXU
                            preferred_element_type=jnp.float32) + bt_ref[...]
            delta = jax.nn.sigmoid(logit) * 0.99 + 0.01            # (tl, 1) f32
            aexp_ref[:, pl.ds(b * ds, ds)] = jnp.exp(a_ref[...] * delta)
            bx_ref[:, pl.ds(b * ds, ds)] = (
                jnp.dot(xb, wb_ref[...], preferred_element_type=jnp.float32)
                + bb_ref[...])
            skip = (jnp.dot(xb, wdo_ref[...],                      # x @ (diag(D) Wo)
                            preferred_element_type=jnp.float32) + bf_ref[...])
            y_ref[b] = skip.astype(y_ref.dtype)

        # ---- stage 2: serial recurrence, 8 timesteps per iteration.  All tb
        #      batch rows advance together in one lane-packed (1, P) row; the
        #      8-step chain is unrolled in vregs and hs is stored as a dense
        #      (8, P) tile.
        def tile_step(i, h):
            base = pl.multiple_of(i * ib, ib)
            a_t = aexp_ref[pl.ds(base, ib), :]
            b_t = bx_ref[pl.ds(base, ib), :]
            rows = []
            for j in range(ib):
                h = a_t[j:j + 1, :] * h + b_t[j:j + 1, :]
                rows.append(h)
            hs_ref[pl.ds(base, ib), :] = jnp.concatenate(rows, axis=0)
            return h

        h = h_ref[...]
        if n_full > 0:
            h = lax.fori_loop(0, n_full, tile_step, h, unroll=unroll)
        if rem > 0:                                   # static remainder chain
            base = n_full * ib
            a_t = aexp_ref[pl.ds(base, rem), :]
            b_t = bx_ref[pl.ds(base, rem), :]
            rows = []
            for j in range(rem):
                h = a_t[j:j + 1, :] * h + b_t[j:j + 1, :]
                rows.append(h)
            tail = rows[0] if rem == 1 else jnp.concatenate(rows, axis=0)
            hs_ref[pl.ds(base, rem), :] = tail
        h_ref[...] = h

        # ---- stage 3: fused output projection, y += hs @ (Wc Wo).
        for b in range(tb):
            hs_b = hs_ref[:, pl.ds(b * ds, ds)].astype(cdt)
            yb = jnp.dot(hs_b, wco_ref[...], preferred_element_type=jnp.float32)
            y_ref[b] = (y_ref[b].astype(jnp.float32) + yb).astype(y_ref.dtype)

    return kernel


# --------------------------------------------------------------------------- #
# Wrapper
# --------------------------------------------------------------------------- #
def selective_scan_pallas(x, params, *, seq_chunk=None, batch_block=None):
    """Forward pass of SelectiveScanModule (dropout = inference identity)."""
    (wt, bt, wb, bb, a, wc, bc, d_skip, wo, bo) = params
    batch, seq_len, d_model = x.shape
    d_state = wb.shape[1]
    cdt = x.dtype                       # MXU operand dtype (bf16 fast path kept)
    f32 = jnp.float32
    hp = jax.lax.Precision.HIGHEST

    # Host-side algebraic fusion of the epilogue:
    #   y = hs @ (Wc Wo) + x @ (diag(D) Wo) + (bc Wo + bo)
    w_co = jnp.dot(wc.astype(f32), wo.astype(f32), precision=hp).astype(cdt)
    w_do = (d_skip.reshape(d_model, 1).astype(f32) * wo.astype(f32)).astype(cdt)
    b_f = (jnp.dot(bc.reshape(1, d_model).astype(f32), wo.astype(f32),
                   precision=hp) + bo.reshape(1, d_model).astype(f32))
    wt_col = wt.reshape(d_model, 1).astype(cdt)      # time_proj as an MXU column
    wb_c = wb.astype(cdt)
    bt_f = bt.reshape(1, 1).astype(f32)
    bb_f = bb.reshape(1, d_state).astype(f32)
    a_f = a.reshape(1, d_state).astype(f32)
    fused_params = (wt_col, bt_f, wb_c, bb_f, a_f, w_co, w_do, b_f)
    param_bytes = sum(int(p.size) * p.dtype.itemsize for p in fused_params)

    # Batch lane-packing block.
    tb = batch_block if batch_block is not None else _pick_batch_block(batch, d_state)
    if batch % tb != 0:
        raise ValueError(f"batch block {tb} must divide batch {batch}")
    pack = tb * d_state
    pad_pack = ((pack + 127) // 128) * 128

    # Generation-aware VMEM budgeting (v7x: 64 MiB/TC vs 128 MiB on v5e/v6e).
    cap = _vmem_capacity_bytes()
    io_item = x.dtype.itemsize
    row_bytes = 2 * tb * d_model * (2 * io_item) + 3 * pad_pack * 4
    budget = max(4 << 20, int(0.35 * cap) - 2 * param_bytes)
    tl = seq_chunk if seq_chunk is not None else _pick_seq_chunk(seq_len, row_bytes, budget)
    if seq_len % tl != 0:
        raise ValueError(f"seq chunk {tl} must divide seq_len {seq_len}")
    if tl != seq_len and tl % 8 != 0:
        raise ValueError(f"seq chunk {tl} must be a multiple of 8 (or == seq_len)")
    n_chunks = seq_len // tl

    est = tl * row_bytes + 8 * pad_pack * 4 + 2 * param_bytes + (1 << 20)
    vmem_limit = int(min(0.9 * cap, max(32 << 20, 2 * est)))

    kernel = _make_kernel(tb, tl, d_state, cdt)
    full2 = lambda b, s: (0, 0)     # small parameter arrays stay fully resident

    flops = batch * seq_len * (
        2 * d_model                       # time_proj
        + 2 * d_model * d_state           # B_proj
        + 2 * d_state * d_model           # hs @ (Wc Wo)
        + 2 * d_model * d_model           # x @ (diag(D) Wo)
        + 4 * d_state + d_model + 4)      # recurrence + delta affine + add
    transcendentals = batch * seq_len * (d_state + 1)
    bytes_accessed = 2 * int(x.size) * x.dtype.itemsize + param_bytes

    return pl.pallas_call(
        kernel,
        out_shape=jax.ShapeDtypeStruct((batch, seq_len, d_model), x.dtype),
        grid=(batch // tb, n_chunks),
        in_specs=[
            pl.BlockSpec((tb, tl, d_model), lambda b, s: (b, s, 0)),  # x chunk
            pl.BlockSpec((d_model, 1), full2),                        # time_proj W (col)
            pl.BlockSpec((1, 1), full2),                              # time_proj b
            pl.BlockSpec((d_model, d_state), full2),                  # B_proj W
            pl.BlockSpec((1, d_state), full2),                        # B_proj b
            pl.BlockSpec((1, d_state), full2),                        # A
            pl.BlockSpec((d_state, d_model), full2),                  # Wc @ Wo
            pl.BlockSpec((d_model, d_model), full2),                  # diag(D) @ Wo
            pl.BlockSpec((1, d_model), full2),                        # bc @ Wo + bo
        ],
        out_specs=pl.BlockSpec((tb, tl, d_model), lambda b, s: (b, s, 0)),
        scratch_shapes=[
            pltpu.VMEM((1, pack), jnp.float32),    # carried state h (lane-packed)
            pltpu.VMEM((tl, pack), jnp.float32),   # exp(A * delta), packed
            pltpu.VMEM((tl, pack), jnp.float32),   # B_proj(x), packed
            pltpu.VMEM((tl, pack), jnp.float32),   # stacked states, packed
        ],
        compiler_params=pltpu.CompilerParams(
            dimension_semantics=("parallel", "arbitrary"),
            vmem_limit_bytes=vmem_limit),
        cost_estimate=pl.CostEstimate(
            flops=flops, transcendentals=transcendentals,
            bytes_accessed=bytes_accessed),
    )(x, *fused_params)


# --------------------------------------------------------------------------- #
# Pure-JAX reference (matches the PyTorch forward; dropout = identity)
# --------------------------------------------------------------------------- #
def selective_scan_ref(x, params):
    (wt, bt, wb, bb, a, wc, bc, d_skip, wo, bo) = params
    hp = jax.lax.Precision.HIGHEST
    delta = jax.nn.sigmoid(
        jnp.sum(x * wt, axis=-1, keepdims=True) + bt) * 0.99 + 0.01
    bx = jnp.einsum("bld,dn->bln", x, wb, precision=hp) + bb
    a_exp = jnp.exp(a * delta)
    b_, _, _ = x.shape
    n_ = wb.shape[1]

    def step(h, inp):
        ae_t, bx_t = inp
        h = ae_t * h + bx_t
        return h, h

    _, hs = jax.lax.scan(step, jnp.zeros((b_, n_), x.dtype),
                         (jnp.swapaxes(a_exp, 0, 1), jnp.swapaxes(bx, 0, 1)))
    hs = jnp.swapaxes(hs, 0, 1)
    outs = jnp.einsum("bln,nd->bld", hs, wc, precision=hp) + bc
    y = outs + x * d_skip
    return jnp.einsum("bld,de->ble", y, wo, precision=hp) + bo


# --------------------------------------------------------------------------- #
# Demo / self-test
# --------------------------------------------------------------------------- #
def _make_params(key, d_model, d_state):
    ks = jax.random.split(key, 10)
    return (
        jax.random.normal(ks[0], (1, d_model), jnp.float32) * 0.1,        # time_proj W
        jax.random.normal(ks[1], (1, 1), jnp.float32) * 0.1,              # time_proj b
        jax.random.normal(ks[2], (d_model, d_state), jnp.float32) * 0.1,  # B_proj W
        jax.random.normal(ks[3], (1, d_state), jnp.float32) * 0.1,        # B_proj b
        jax.random.normal(ks[4], (1, d_state), jnp.float32) * 0.1 - 1.0,  # A
        jax.random.normal(ks[5], (d_state, d_model), jnp.float32) * 0.1,  # C_proj W
        jax.random.normal(ks[6], (1, d_model), jnp.float32) * 0.1,        # C_proj b
        jnp.ones((1, d_model), jnp.float32),                              # D
        jax.random.normal(ks[7], (d_model, d_model), jnp.float32) * 0.1,  # out_proj W
        jax.random.normal(ks[8], (1, d_model), jnp.float32) * 0.1,        # out_proj b
    )


def _run_case(key, batch, seq_len, d_model, d_state, seq_chunk):
    kx, kp = jax.random.split(key)
    x = jax.random.normal(kx, (batch, seq_len, d_model), jnp.float32)
    params = _make_params(kp, d_model, d_state)

    y = selective_scan_pallas(x, params, seq_chunk=seq_chunk)
    jax.block_until_ready(y)
    assert y.shape == (batch, seq_len, d_model)

    y_ref = selective_scan_ref(x, params)
    err = float(jnp.max(jnp.abs(y - y_ref)))
    assert err < 5e-2, f"max abs error vs reference: {err}"
    return err


if __name__ == "__main__":
    key = jax.random.PRNGKey(0)
    k1, k2 = jax.random.split(key)

    # Case 1: multi-chunk carried state + batch lane-packing (tb = 2).
    _run_case(k1, batch=4, seq_len=24, d_model=32, d_state=16, seq_chunk=8)
    # Case 2: single chunk with an 8-step remainder tail (tl = 12, tb = 1).
    _run_case(k2, batch=2, seq_len=12, d_model=32, d_state=16, seq_chunk=None)

    print("KERNEL_OK")
</pallas_src>

<mosaic_0001>
module attributes {stable_mosaic.version = 11 : i64} {
  func.func @kernel(%arg0: i32, %arg1: i32, %arg2: memref<2x8x32xf32, #tpu.memory_space<vmem>>, %arg3: memref<32x1xf32, #tpu.memory_space<vmem>>, %arg4: memref<1x1xf32, #tpu.memory_space<vmem>>, %arg5: memref<32x16xf32, #tpu.memory_space<vmem>>, %arg6: memref<1x16xf32, #tpu.memory_space<vmem>>, %arg7: memref<1x16xf32, #tpu.memory_space<vmem>>, %arg8: memref<16x32xf32, #tpu.memory_space<vmem>>, %arg9: memref<32x32xf32, #tpu.memory_space<vmem>>, %arg10: memref<1x32xf32, #tpu.memory_space<vmem>>, %arg11: memref<2x8x32xf32, #tpu.memory_space<vmem>>, %arg12: memref<1x32xf32, #tpu.memory_space<vmem>>, %arg13: memref<8x32xf32, #tpu.memory_space<vmem>>, %arg14: memref<8x32xf32, #tpu.memory_space<vmem>>, %arg15: memref<8x32xf32, #tpu.memory_space<vmem>>) attributes {dimension_semantics = [#tpu.dimension_semantics<parallel>, #tpu.dimension_semantics<arbitrary>], iteration_bounds = array<i64: 2, 3>, scalar_prefetch = 0 : i64, scratch_operands = 4 : i64, tpu.core_type = #tpu.core_type<tc>, window_params = [{transform_indices = @transform_0, window_bounds = array<i64: 2, 8, 32>}, {pipeline_mode = #tpu.pipeline_mode<synchronous>, transform_indices = @transform_1, window_bounds = array<i64: 32, 1>}, {pipeline_mode = #tpu.pipeline_mode<synchronous>, transform_indices = @transform_2, window_bounds = array<i64: 1, 1>}, {pipeline_mode = #tpu.pipeline_mode<synchronous>, transform_indices = @transform_3, window_bounds = array<i64: 32, 16>}, {pipeline_mode = #tpu.pipeline_mode<synchronous>, transform_indices = @transform_4, window_bounds = array<i64: 1, 16>}, {pipeline_mode = #tpu.pipeline_mode<synchronous>, transform_indices = @transform_5, window_bounds = array<i64: 1, 16>}, {pipeline_mode = #tpu.pipeline_mode<synchronous>, transform_indices = @transform_6, window_bounds = array<i64: 16, 32>}, {pipeline_mode = #tpu.pipeline_mode<synchronous>, transform_indices = @transform_7, window_bounds = array<i64: 32, 32>}, {pipeline_mode = #tpu.pipeline_mode<synchronous>, transform_indices = @transform_8, window_bounds = array<i64: 1, 32>}, {transform_indices = @transform_9, window_bounds = array<i64: 2, 8, 32>}]} {
    %c0_i32 = arith.constant 0 : i32
    %0 = arith.cmpi eq, %arg1, %c0_i32 : i32
    %1 = arith.extui %0 : i1 to i32
    %c0_i32_0 = arith.constant 0 : i32
    %2 = arith.cmpi ne, %1, %c0_i32_0 : i32
    scf.if %2 {
      %cst_87 = arith.constant 0.000000e+00 : f32
      %136 = vector.broadcast %cst_87 : f32 to vector<1x32xf32>
      %c0_88 = arith.constant 0 : index
      %c0_89 = arith.constant 0 : index
      %137 = vector.load %arg12[%c0_88, %c0_89] : memref<1x32xf32, #tpu.memory_space<vmem>>, vector<1x32xf32>
      tpu.vector_store %arg12[%c0_88, %c0_89], %136 {strides = array<i32>} : memref<1x32xf32, #tpu.memory_space<vmem>>, vector<1x32xf32>,
    } else {
    }
    %c0 = arith.constant 0 : index
    %c0_1 = arith.constant 0 : index
    %c0_2 = arith.constant 0 : index
    %3 = vector.load %arg2[%c0, %c0_1, %c0_2] : memref<2x8x32xf32, #tpu.memory_space<vmem>>, vector<1x8x32xf32>
    %4 = vector.shape_cast %3 : vector<1x8x32xf32> to vector<8x32xf32>
    %c0_3 = arith.constant 0 : index
    %c0_4 = arith.constant 0 : index
    %5 = vector.load %arg3[%c0_3, %c0_4] : memref<32x1xf32, #tpu.memory_space<vmem>>, vector<32x1xf32>
    %cst = arith.constant dense<0.000000e+00> : vector<8x1xf32>
    %6 = tpu.matmul %4, %5, %cst {dimension_numbers = #tpu.dot_dimension_numbers<[1], [0], [0], [1], [0, 0, 1, 1], [], []>} : vector<8x32xf32>, vector<32x1xf32>, vector<8x1xf32> -> vector<8x1xf32>
    %c0_5 = arith.constant 0 : index
    %c0_6 = arith.constant 0 : index
    %7 = vector.load %arg4[%c0_5, %c0_6] : memref<1x1xf32, #tpu.memory_space<vmem>>, vector<1x1xf32>
    %8 = vector.broadcast %7 : vector<1x1xf32> to vector<8x1xf32>
    %9 = arith.addf %6, %8 : vector<8x1xf32>
    %10 = arith.negf %9 : vector<8x1xf32>
    %11 = math.exp %10 : vector<8x1xf32>
    %cst_7 = arith.constant 1.000000e+00 : f32
    %12 = vector.broadcast %cst_7 : f32 to vector<8x1xf32>
    %13 = arith.addf %12, %11 : vector<8x1xf32>
    %14 = arith.divf %12, %13 : vector<8x1xf32>
    %cst_8 = arith.constant 9.900000e-01 : f32
    %15 = vector.broadcast %cst_8 : f32 to vector<8x1xf32>
    %16 = arith.mulf %14, %15 : vector<8x1xf32>
    %cst_9 = arith.constant 0.00999999977 : f32
    %17 = vector.broadcast %cst_9 : f32 to vector<8x1xf32>
    %18 = arith.addf %16, %17 : vector<8x1xf32>
    %c0_10 = arith.constant 0 : index
    %c0_11 = arith.constant 0 : index
    %19 = vector.load %arg7[%c0_10, %c0_11] : memref<1x16xf32, #tpu.memory_space<vmem>>, vector<1x16xf32>
    %20 = vector.broadcast %19 : vector<1x16xf32> to vector<8x16xf32>
    %21 = vector.broadcast %18 : vector<8x1xf32> to vector<8x16xf32>
    %22 = arith.mulf %20, %21 : vector<8x16xf32>
    %23 = math.exp %22 : vector<8x16xf32>
    %c0_12 = arith.constant 0 : index
    %c0_13 = arith.constant 0 : index
    %24 = vector.load %arg13[%c0_12, %c0_13] : memref<8x32xf32, #tpu.memory_space<vmem>>, vector<8x16xf32>
    tpu.vector_store %arg13[%c0_12, %c0_13], %23 {strides = array<i32>} : memref<8x32xf32, #tpu.memory_space<vmem>>, vector<8x16xf32>,
    %c0_14 = arith.constant 0 : index
    %c0_15 = arith.constant 0 : index
    %25 = vector.load %arg5[%c0_14, %c0_15] : memref<32x16xf32, #tpu.memory_space<vmem>>, vector<32x16xf32>
    %cst_16 = arith.constant dense<0.000000e+00> : vector<8x16xf32>
    %26 = tpu.matmul %4, %25, %cst_16 {dimension_numbers = #tpu.dot_dimension_numbers<[1], [0], [0], [1], [0, 0, 1, 1], [], []>} : vector<8x32xf32>, vector<32x16xf32>, vector<8x16xf32> -> vector<8x16xf32>
    %c0_17 = arith.constant 0 : index
    %c0_18 = arith.constant 0 : index
    %27 = vector.load %arg6[%c0_17, %c0_18] : memref<1x16xf32, #tpu.memory_space<vmem>>, vector<1x16xf32>
    %28 = vector.broadcast %27 : vector<1x16xf32> to vector<8x16xf32>
    %29 = arith.addf %26, %28 : vector<8x16xf32>
    %c0_19 = arith.constant 0 : index
    %c0_20 = arith.constant 0 : index
    %30 = vector.load %arg14[%c0_19, %c0_20] : memref<8x32xf32, #tpu.memory_space<vmem>>, vector<8x16xf32>
    tpu.vector_store %arg14[%c0_19, %c0_20], %29 {strides = array<i32>} : memref<8x32xf32, #tpu.memory_space<vmem>>, vector<8x16xf32>,
    %c0_21 = arith.constant 0 : index
    %c0_22 = arith.constant 0 : index
    %31 = vector.load %arg9[%c0_21, %c0_22] : memref<32x32xf32, #tpu.memory_space<vmem>>, vector<32x32xf32>
    %cst_23 = arith.constant dense<0.000000e+00> : vector<8x32xf32>
    %32 = tpu.matmul %4, %31, %cst_23 {dimension_numbers = #tpu.dot_dimension_numbers<[1], [0], [0], [1], [0, 0, 1, 1], [], []>} : vector<8x32xf32>, vector<32x32xf32>, vector<8x32xf32> -> vector<8x32xf32>
    %c0_24 = arith.constant 0 : index
    %c0_25 = arith.constant 0 : index
    %33 = vector.load %arg10[%c0_24, %c0_25] : memref<1x32xf32, #tpu.memory_space<vmem>>, vector<1x32xf32>
    %34 = vector.broadcast %33 : vector<1x32xf32> to vector<8x32xf32>
    %35 = arith.addf %32, %34 : vector<8x32xf32>
    %c0_26 = arith.constant 0 : index
    %c0_27 = arith.constant 0 : index
    %c0_28 = arith.constant 0 : index
    %36 = vector.load %arg11[%c0_26, %c0_27, %c0_28] : memref<2x8x32xf32, #tpu.memory_space<vmem>>, vector<1x8x32xf32>
    %37 = vector.shape_cast %36 : vector<1x8x32xf32> to vector<8x32xf32>
    %38 = vector.shape_cast %35 : vector<8x32xf32> to vector<1x8x32xf32>
    tpu.vector_store %arg11[%c0_26, %c0_27, %c0_28], %38 {strides = array<i32>} : memref<2x8x32xf32, #tpu.memory_space<vmem>>, vector<1x8x32xf32>,
    %c1 = arith.constant 1 : index
    %c0_29 = arith.constant 0 : index
    %c0_30 = arith.constant 0 : index
    %39 = vector.load %arg2[%c1, %c0_29, %c0_30] : memref<2x8x32xf32, #tpu.memory_space<vmem>>, vector<1x8x32xf32>
    %40 = vector.shape_cast %39 : vector<1x8x32xf32> to vector<8x32xf32>
    %c0_31 = arith.constant 0 : index
    %c0_32 = arith.constant 0 : index
    %41 = vector.load %arg3[%c0_31, %c0_32] : memref<32x1xf32, #tpu.memory_space<vmem>>, vector<32x1xf32>
    %cst_33 = arith.constant dense<0.000000e+00> : vector<8x1xf32>
    %42 = tpu.matmul %40, %41, %cst_33 {dimension_numbers = #tpu.dot_dimension_numbers<[1], [0], [0], [1], [0, 0, 1, 1], [], []>} : vector<8x32xf32>, vector<32x1xf32>, vector<8x1xf32> -> vector<8x1xf32>
    %c0_34 = arith.constant 0 : index
    %c0_35 = arith.constant 0 : index
    %43 = vector.load %arg4[%c0_34, %c0_35] : memref<1x1xf32, #tpu.memory_space<vmem>>, vector<1x1xf32>
    %44 = vector.broadcast %43 : vector<1x1xf32> to vector<8x1xf32>
    %45 = arith.addf %42, %44 : vector<8x1xf32>
    %46 = arith.negf %45 : vector<8x1xf32>
    %47 = math.exp %46 : vector<8x1xf32>
    %cst_36 = arith.constant 1.000000e+00 : f32
    %48 = vector.broadcast %cst_36 : f32 to vector<8x1xf32>
    %49 = arith.addf %48, %47 : vector<8x1xf32>
    %50 = arith.divf %48, %49 : vector<8x1xf32>
    %cst_37 = arith.constant 9.900000e-01 : f32
    %51 = vector.broadcast %cst_37 : f32 to vector<8x1xf32>
    %52 = arith.mulf %50, %51 : vector<8x1xf32>
    %cst_38 = arith.constant 0.00999999977 : f32
    %53 = vector.broadcast %cst_38 : f32 to vector<8x1xf32>
    %54 = arith.addf %52, %53 : vector<8x1xf32>
    %c0_39 = arith.constant 0 : index
    %c0_40 = arith.constant 0 : index
    %55 = vector.load %arg7[%c0_39, %c0_40] : memref<1x16xf32, #tpu.memory_space<vmem>>, vector<1x16xf32>
    %56 = vector.broadcast %55 : vector<1x16xf32> to vector<8x16xf32>
    %57 = vector.broadcast %54 : vector<8x1xf32> to vector<8x16xf32>
    %58 = arith.mulf %56, %57 : vector<8x16xf32>
    %59 = math.exp %58 : vector<8x16xf32>
    %c0_41 = arith.constant 0 : index
    %c16 = arith.constant 16 : index
    %60 = vector.load %arg13[%c0_41, %c16] : memref<8x32xf32, #tpu.memory_space<vmem>>, vector<8x16xf32>
    tpu.vector_store %arg13[%c0_41, %c16], %59 {strides = array<i32>} : memref<8x32xf32, #tpu.memory_space<vmem>>, vector<8x16xf32>,
    %c0_42 = arith.constant 0 : index
    %c0_43 = arith.constant 0 : index
    %61 = vector.load %arg5[%c0_42, %c0_43] : memref<32x16xf32, #tpu.memory_space<vmem>>, vector<32x16xf32>
    %cst_44 = arith.constant dense<0.000000e+00> : vector<8x16xf32>
    %62 = tpu.matmul %40, %61, %cst_44 {dimension_numbers = #tpu.dot_dimension_numbers<[1], [0], [0], [1], [0, 0, 1, 1], [], []>} : vector<8x32xf32>, vector<32x16xf32>, vector<8x16xf32> -> vector<8x16xf32>
    %c0_45 = arith.constant 0 : index
    %c0_46 = arith.constant 0 : index
    %63 = vector.load %arg6[%c0_45, %c0_46] : memref<1x16xf32, #tpu.memory_space<vmem>>, vector<1x16xf32>
    %64 = vector.broadcast %63 : vector<1x16xf32> to vector<8x16xf32>
    %65 = arith.addf %62, %64 : vector<8x16xf32>
    %c0_47 = arith.constant 0 : index
    %c16_48 = arith.constant 16 : index
    %66 = vector.load %arg14[%c0_47, %c16_48] : memref<8x32xf32, #tpu.memory_space<vmem>>, vector<8x16xf32>
    tpu.vector_store %arg14[%c0_47, %c16_48], %65 {strides = array<i32>} : memref<8x32xf32, #tpu.memory_space<vmem>>, vector<8x16xf32>,
    %c0_49 = arith.constant 0 : index
    %c0_50 = arith.constant 0 : index
    %67 = vector.load %arg9[%c0_49, %c0_50] : memref<32x32xf32, #tpu.memory_space<vmem>>, vector<32x32xf32>
    %cst_51 = arith.constant dense<0.000000e+00> : vector<8x32xf32>
    %68 = tpu.matmul %40, %67, %cst_51 {dimension_numbers = #tpu.dot_dimension_numbers<[1], [0], [0], [1], [0, 0, 1, 1], [], []>} : vector<8x32xf32>, vector<32x32xf32>, vector<8x32xf32> -> vector<8x32xf32>
    %c0_52 = arith.constant 0 : index
    %c0_53 = arith.constant 0 : index
    %69 = vector.load %arg10[%c0_52, %c0_53] : memref<1x32xf32, #tpu.memory_space<vmem>>, vector<1x32xf32>
    %70 = vector.broadcast %69 : vector<1x32xf32> to vector<8x32xf32>
    %71 = arith.addf %68, %70 : vector<8x32xf32>
    %c1_54 = arith.constant 1 : index
    %c0_55 = arith.constant 0 : index
    %c0_56 = arith.constant 0 : index
    %72 = vector.load %arg11[%c1_54, %c0_55, %c0_56] : memref<2x8x32xf32, #tpu.memory_space<vmem>>, vector<1x8x32xf32>
    %73 = vector.shape_cast %72 : vector<1x8x32xf32> to vector<8x32xf32>
    %74 = vector.shape_cast %71 : vector<8x32xf32> to vector<1x8x32xf32>
    tpu.vector_store %arg11[%c1_54, %c0_55, %c0_56], %74 {strides = array<i32>} : memref<2x8x32xf32, #tpu.memory_space<vmem>>, vector<1x8x32xf32>,
    %c0_57 = arith.constant 0 : index
    %c0_58 = arith.constant 0 : index
    %75 = vector.load %arg12[%c0_57, %c0_58] : memref<1x32xf32, #tpu.memory_space<vmem>>, vector<1x32xf32>
    %c0_i32_59 = arith.constant 0 : i32
    %c8_i32 = arith.constant 8 : i32
    %76 = arith.muli %c0_i32_59, %c8_i32 : i32
    %77 = tpu.assume_multiple %76, 8 : i32
    %78 = arith.index_cast %77 : i32 to index
    %c0_60 = arith.constant 0 : index
    %79 = vector.load %arg13[%78, %c0_60] : memref<8x32xf32, #tpu.memory_space<vmem>>, vector<8x32xf32>
    %80 = arith.index_cast %77 : i32 to index
    %c0_61 = arith.constant 0 : index
    %81 = vector.load %arg14[%80, %c0_61] : memref<8x32xf32, #tpu.memory_space<vmem>>, vector<8x32xf32>
    %82 = vector.extract_strided_slice %79 {offsets = [0, 0], sizes = [1, 32], strides = [1, 1]} : vector<8x32xf32> to vector<1x32xf32>
    %83 = arith.mulf %82, %75 : vector<1x32xf32>
    %84 = vector.extract_strided_slice %81 {offsets = [0, 0], sizes = [1, 32], strides = [1, 1]} : vector<8x32xf32> to vector<1x32xf32>
    %85 = arith.addf %83, %84 : vector<1x32xf32>
    %86 = vector.extract_strided_slice %79 {offsets = [1, 0], sizes = [1, 32], strides = [1, 1]} : vector<8x32xf32> to vector<1x32xf32>
    %87 = arith.mulf %86, %85 : vector<1x32xf32>
    %88 = vector.extract_strided_slice %81 {offsets = [1, 0], sizes = [1, 32], strides = [1, 1]} : vector<8x32xf32> to vector<1x32xf32>
    %89 = arith.addf %87, %88 : vector<1x32xf32>
    %90 = vector.extract_strided_slice %79 {offsets = [2, 0], sizes = [1, 32], strides = [1, 1]} : vector<8x32xf32> to vector<1x32xf32>
    %91 = arith.mulf %90, %89 : vector<1x32xf32>
    %92 = vector.extract_strided_slice %81 {offsets = [2, 0], sizes = [1, 32], strides = [1, 1]} : vector<8x32xf32> to vector<1x32xf32>
    %93 = arith.addf %91, %92 : vector<1x32xf32>
    %94 = vector.extract_strided_slice %79 {offsets = [3, 0], sizes = [1, 32], strides = [1, 1]} : vector<8x32xf32> to vector<1x32xf32>
    %95 = arith.mulf %94, %93 : vector<1x32xf32>
    %96 = vector.extract_strided_slice %81 {offsets = [3, 0], sizes = [1, 32], strides = [1, 1]} : vector<8x32xf32> to vector<1x32xf32>
    %97 = arith.addf %95, %96 : vector<1x32xf32>
    %98 = vector.extract_strided_slice %79 {offsets = [4, 0], sizes = [1, 32], strides = [1, 1]} : vector<8x32xf32> to vector<1x32xf32>
    %99 = arith.mulf %98, %97 : vector<1x32xf32>
    %100 = vector.extract_strided_slice %81 {offsets = [4, 0], sizes = [1, 32], strides = [1, 1]} : vector<8x32xf32> to vector<1x32xf32>
    %101 = arith.addf %99, %100 : vector<1x32xf32>
    %102 = vector.extract_strided_slice %79 {offsets = [5, 0], sizes = [1, 32], strides = [1, 1]} : vector<8x32xf32> to vector<1x32xf32>
    %103 = arith.mulf %102, %101 : vector<1x32xf32>
    %104 = vector.extract_strided_slice %81 {offsets = [5, 0], sizes = [1, 32], strides = [1, 1]} : vector<8x32xf32> to vector<1x32xf32>
    %105 = arith.addf %103, %104 : vector<1x32xf32>
    %106 = vector.extract_strided_slice %79 {offsets = [6, 0], sizes = [1, 32], strides = [1, 1]} : vector<8x32xf32> to vector<1x32xf32>
    %107 = arith.mulf %106, %105 : vector<1x32xf32>
    %108 = vector.extract_strided_slice %81 {offsets = [6, 0], sizes = [1, 32], strides = [1, 1]} : vector<8x32xf32> to vector<1x32xf32>
    %109 = arith.addf %107, %108 : vector<1x32xf32>
    %110 = vector.extract_strided_slice %79 {offsets = [7, 0], sizes = [1, 32], strides = [1, 1]} : vector<8x32xf32> to vector<1x32xf32>
    %111 = arith.mulf %110, %109 : vector<1x32xf32>
    %112 = vector.extract_strided_slice %81 {offsets = [7, 0], sizes = [1, 32], strides = [1, 1]} : vector<8x32xf32> to vector<1x32xf32>
    %113 = arith.addf %111, %112 : vector<1x32xf32>
    %114 = tpu.concatenate %85, %89, %93, %97, %101, %105, %109, %113 in 0 : vector<1x32xf32>, vector<1x32xf32>, vector<1x32xf32>, vector<1x32xf32>, vector<1x32xf32>, vector<1x32xf32>, vector<1x32xf32>, vector<1x32xf32> -> vector<8x32xf32>
    %115 = arith.index_cast %77 : i32 to index
    %c0_62 = arith.constant 0 : index
    %116 = vector.load %arg15[%115, %c0_62] : memref<8x32xf32, #tpu.memory_space<vmem>>, vector<8x32xf32>
    tpu.vector_store %arg15[%115, %c0_62], %114 {strides = array<i32>} : memref<8x32xf32, #tpu.memory_space<vmem>>, vector<8x32xf32>,
    %c1_i32 = arith.constant 1 : i32
    %c0_63 = arith.constant 0 : index
    %c0_64 = arith.constant 0 : index
    %117 = vector.load %arg12[%c0_63, %c0_64] : memref<1x32xf32, #tpu.memory_space<vmem>>, vector<1x32xf32>
    tpu.vector_store %arg12[%c0_63, %c0_64], %113 {strides = array<i32>} : memref<1x32xf32, #tpu.memory_space<vmem>>, vector<1x32xf32>,
    %c0_65 = arith.constant 0 : index
    %c0_66 = arith.constant 0 : index
    %118 = vector.load %arg15[%c0_65, %c0_66] : memref<8x32xf32, #tpu.memory_space<vmem>>, vector<8x16xf32>
    %c0_67 = arith.constant 0 : index
    %c0_68 = arith.constant 0 : index
    %119 = vector.load %arg8[%c0_67, %c0_68] : memref<16x32xf32, #tpu.memory_space<vmem>>, vector<16x32xf32>
    %cst_69 = arith.constant dense<0.000000e+00> : vector<8x32xf32>
    %120 = tpu.matmul %118, %119, %cst_69 {dimension_numbers = #tpu.dot_dimension_numbers<[1], [0], [0], [1], [0, 0, 1, 1], [], []>} : vector<8x16xf32>, vector<16x32xf32>, vector<8x32xf32> -> vector<8x32xf32>
    %c0_70 = arith.constant 0 : index
    %c0_71 = arith.constant 0 : index
    %c0_72 = arith.constant 0 : index
    %121 = vector.load %arg11[%c0_70, %c0_71, %c0_72] : memref<2x8x32xf32, #tpu.memory_space<vmem>>, vector<1x8x32xf32>
    %122 = vector.shape_cast %121 : vector<1x8x32xf32> to vector<8x32xf32>
    %123 = arith.addf %122, %120 : vector<8x32xf32>
    %c0_73 = arith.constant 0 : index
    %c0_74 = arith.constant 0 : index
    %c0_75 = arith.constant 0 : index
    %124 = vector.load %arg11[%c0_73, %c0_74, %c0_75] : memref<2x8x32xf32, #tpu.memory_space<vmem>>, vector<1x8x32xf32>
    %125 = vector.shape_cast %124 : vector<1x8x32xf32> to vector<8x32xf32>
    %126 = vector.shape_cast %123 : vector<8x32xf32> to vector<1x8x32xf32>
    tpu.vector_store %arg11[%c0_73, %c0_74, %c0_75], %126 {strides = array<i32>} : memref<2x8x32xf32, #tpu.memory_space<vmem>>, vector<1x8x32xf32>,
    %c0_76 = arith.constant 0 : index
    %c16_77 = arith.constant 16 : index
    %127 = vector.load %arg15[%c0_76, %c16_77] : memref<8x32xf32, #tpu.memory_space<vmem>>, vector<8x16xf32>
    %c0_78 = arith.constant 0 : index
    %c0_79 = arith.constant 0 : index
    %128 = vector.load %arg8[%c0_78, %c0_79] : memref<16x32xf32, #tpu.memory_space<vmem>>, vector<16x32xf32>
    %cst_80 = arith.constant dense<0.000000e+00> : vector<8x32xf32>
    %129 = tpu.matmul %127, %128, %cst_80 {dimension_numbers = #tpu.dot_dimension_numbers<[1], [0], [0], [1], [0, 0, 1, 1], [], []>} : vector<8x16xf32>, vector<16x32xf32>, vector<8x32xf32> -> vector<8x32xf32>
    %c1_81 = arith.constant 1 : index
    %c0_82 = arith.constant 0 : index
    %c0_83 = arith.constant 0 : index
    %130 = vector.load %arg11[%c1_81, %c0_82, %c0_83] : memref<2x8x32xf32, #tpu.memory_space<vmem>>, vector<1x8x32xf32>
    %131 = vector.shape_cast %130 : vector<1x8x32xf32> to vector<8x32xf32>
    %132 = arith.addf %131, %129 : vector<8x32xf32>
    %c1_84 = arith.constant 1 : index
    %c0_85 = arith.constant 0 : index
    %c0_86 = arith.constant 0 : index
    %133 = vector.load %arg11[%c1_84, %c0_85, %c0_86] : memref<2x8x32xf32, #tpu.memory_space<vmem>>, vector<1x8x32xf32>
    %134 = vector.shape_cast %133 : vector<1x8x32xf32> to vector<8x32xf32>
    %135 = vector.shape_cast %132 : vector<8x32xf32> to vector<1x8x32xf32>
    tpu.vector_store %arg11[%c1_84, %c0_85, %c0_86], %135 {strides = array<i32>} : memref<2x8x32xf32, #tpu.memory_space<vmem>>, vector<1x8x32xf32>,
    return
  }
  func.func @transform_0(%arg0: i32, %arg1: i32) -> (i32, i32, i32) {
    %c0_i32 = arith.constant 0 : i32
    %c0_i32_0 = arith.constant 0 : i32
    return %arg0, %arg1, %c0_i32 : i32, i32, i32
  }
  func.func @transform_1(%arg0: i32, %arg1: i32) -> (i32, i32) {
    %c0_i32 = arith.constant 0 : i32
    %c0_i32_0 = arith.constant 0 : i32
    %c0_i32_1 = arith.constant 0 : i32
    return %c0_i32, %c0_i32_0 : i32, i32
  }
  func.func @transform_2(%arg0: i32, %arg1: i32) -> (i32, i32) {
    %c0_i32 = arith.constant 0 : i32
    %c0_i32_0 = arith.constant 0 : i32
    %c0_i32_1 = arith.constant 0 : i32
    return %c0_i32, %c0_i32_0 : i32, i32
  }
  func.func @transform_3(%arg0: i32, %arg1: i32) -> (i32, i32) {
    %c0_i32 = arith.constant 0 : i32
    %c0_i32_0 = arith.constant 0 : i32
    %c0_i32_1 = arith.constant 0 : i32
    return %c0_i32, %c0_i32_0 : i32, i32
  }
  func.func @transform_4(%arg0: i32, %arg1: i32) -> (i32, i32) {
    %c0_i32 = arith.constant 0 : i32
    %c0_i32_0 = arith.constant 0 : i32
    %c0_i32_1 = arith.constant 0 : i32
    return %c0_i32, %c0_i32_0 : i32, i32
  }
  func.func @transform_5(%arg0: i32, %arg1: i32) -> (i32, i32) {
    %c0_i32 = arith.constant 0 : i32
    %c0_i32_0 = arith.constant 0 : i32
    %c0_i32_1 = arith.constant 0 : i32
    return %c0_i32, %c0_i32_0 : i32, i32
  }
  func.func @transform_6(%arg0: i32, %arg1: i32) -> (i32, i32) {
    %c0_i32 = arith.constant 0 : i32
    %c0_i32_0 = arith.constant 0 : i32
    %c0_i32_1 = arith.constant 0 : i32
    return %c0_i32, %c0_i32_0 : i32, i32
  }
  func.func @transform_7(%arg0: i32, %arg1: i32) -> (i32, i32) {
    %c0_i32 = arith.constant 0 : i32
    %c0_i32_0 = arith.constant 0 : i32
    %c0_i32_1 = arith.constant 0 : i32
    return %c0_i32, %c0_i32_0 : i32, i32
  }
  func.func @transform_8(%arg0: i32, %arg1: i32) -> (i32, i32) {
    %c0_i32 = arith.constant 0 : i32
    %c0_i32_0 = arith.constant 0 : i32
    %c0_i32_1 = arith.constant 0 : i32
    return %c0_i32, %c0_i32_0 : i32, i32
  }
  func.func @transform_9(%arg0: i32, %arg1: i32) -> (i32, i32, i32) {
    %c0_i32 = arith.constant 0 : i32
    %c0_i32_0 = arith.constant 0 : i32
    return %arg0, %arg1, %c0_i32 : i32, i32, i32
  }
}

</mosaic_0001>

<llo_original>
// kernel: tpu_custom_call.1
$region0: #{tpu_custom_call.1}
  #allocation0 [shape = 'u32[]', space=smem, size = 0x4, offset = 0x4, fixed_abs, tag = 'smem constant byte address 0x4 - core index']
  #allocation1 [shape = 'u32[144,128]{1,0:T(1,128)}', space=vmem, size = 0x12000, scoped, tag = 'internal scratch']
  #allocation2 [shape = 'f32[1,32]{1,0:T(1,128)}', space=vmem, size = 0x200, scoped, tag = 'scratch operand']
  #allocation3 [shape = 'f32[8,32]{1,0:T(8,128)}', space=vmem, size = 0x1000, scoped, tag = 'scratch operand']
  #allocation4 [shape = 'f32[8,32]{1,0:T(8,128)}', space=vmem, size = 0x1000, scoped, tag = 'scratch operand']
  #allocation5 [shape = 'f32[8,32]{1,0:T(8,128)}', space=vmem, size = 0x1000, scoped, tag = 'scratch operand']
  #allocation6 [shape = 'f32[1,1]{1,0:T(1,128)S(1)}', space=vmem, size = 0x200, scoped, tag = 'scoped memory for tpu_custom_call.1']
  %s0 = inlined_call_operand.hbm [shape: f32[4,24,32], index: 0, kind: input, shape index: {}]
  %s1 = inlined_call_operand.vmem [shape: f32[32,1], index: 1, kind: input, shape index: {}]
  %s2 = inlined_call_operand.<no memory space> [shape: f32[1,1], index: 2, kind: input, shape index: {}]
  %s3 = inlined_call_operand.vmem [shape: f32[32,16], index: 3, kind: input, shape index: {}]
  %s4 = inlined_call_operand.vmem [shape: f32[1,16], index: 4, kind: input, shape index: {}]
  %s5 = inlined_call_operand.vmem [shape: f32[1,16], index: 5, kind: input, shape index: {}]
  %s6 = inlined_call_operand.vmem [shape: f32[16,32], index: 6, kind: input, shape index: {}]
  %s7 = inlined_call_operand.vmem [shape: f32[32,32], index: 7, kind: input, shape index: {}]
  %s8 = inlined_call_operand.vmem [shape: f32[1,32], index: 8, kind: input, shape index: {}]
  %s9 = inlined_call_operand.hbm [shape: f32[4,24,32], index: 9, kind: output, shape index: {}]
  %s10 = sld [smem:[#allocation0]]
  $region77: #{tpu_custom_call.1} parent=0
    _
  %s12 = ssub.s32 1, %s10
  %s13 = scalar_select 0, %s12, %s10
  %v14 = vstv %s2
  %15 = vst [vmem:[#allocation6] sm:$0x1] %v14
  $region1: #{tpu_custom_call.1} parent=0
    #allocation7 [shape = 'u8[16384]{0}', space=vmem, size = 0x4000, scoped, tag = 'input window, operand 0']
    #allocation8 [shape = 's32[2]{0}', space=sflag, size = 0x8, scoped, tag = 'scoped memory for tpu_custom_call.1']
    #allocation9 [shape = 's32[2]{0}', space=sflag, size = 0x8, scoped, tag = 'scoped memory for tpu_custom_call.1']
    #allocation10 [shape = 'u8[16384]{0}', space=vmem, size = 0x4000, scoped, tag = 'output window, operand 0']
    %16 = vsyncpa [#allocation8], 0
    %s17 = scalar_lea.sflag [#allocation8], 1
    %18 = vsyncpa %s17, 0
    %19 = vsyncpa [#allocation9], 0
    %s20 = scalar_lea.sflag [#allocation9], 1
    %21 = vsyncpa %s20, 0
    loop: start=0, step=1, limit=8
    $region2: #{tpu_custom_call.1} parent=1 // loop_pre_header
      _
    $region3: #{tpu_custom_call.1} parent=1 // loop_header
      %s23 = sphi 0, %s27
      %p24 = scmp.ge.s32.totalorder %s23, 8
      %s30 = sphi 0, %s42
      %s31 = sphi 0, %s38
      %s32 = sphi 0, %s30
      %s33 = sphi 0, %s31
      %s34 = sphi 0, %s32
      %s35 = sphi 0, %s33
      %s47 = sphi 0, %s49
      %s50 = sphi 0, %s47
      %s51 = sphi 0, %s50
      %s67 = sphi 0, %s51
      %s71 = sphi 0, %s71
      %s73 = sphi 0, %s71
      %s74 = sphi 0, %s73
      %s88 = sphi 0, %s74
      %s92 = sphi 0, %s92
      %s94 = sphi 0, %s92
      %s95 = sphi 0, %s94
      %s109 = sphi 0, %s95
      %s113 = sphi 0, %s113
      %s115 = sphi 0, %s113
      %s116 = sphi 0, %s115
      %s130 = sphi 0, %s116
      %s134 = sphi 0, %s134
      %s136 = sphi 0, %s134
      %s137 = sphi 0, %s136
      %s151 = sphi 0, %s137
      %s155 = sphi 0, %s155
      %s157 = sphi 0, %s155
      %s158 = sphi 0, %s157
      %s172 = sphi 0, %s158
      %s176 = sphi 0, %s176
      %s178 = sphi 0, %s176
      %s179 = sphi 0, %s178
      %s193 = sphi 0, %s179
      %s197 = sphi 0, %s197
      %s199 = sphi 0, %s197
      %s200 = sphi 0, %s199
      %s214 = sphi 0, %s200
      %s218 = sphi 0, %s218
      %s220 = sphi 0, %s218
      %s221 = sphi 0, %s220
      %s235 = sphi 0, %s221
      %s243 = sphi 0, %s245
      %s246 = sphi 0, %s243
      %s247 = sphi 0, %s246
      %s263 = sphi 0, %s247
    $region4: #{tpu_custom_call.1} parent=1 // loop_header_branch
      %26 = sbr.rel (%p24) target = $region8
    $region5: #{tpu_custom_call.1} parent=1 // loop_body
      %s28 = ssub.s32 %s23, 1
      %s29 = ssub.s32 %s23, 2
      %s36 = sadd.s32 1, %s31
      %p37 = scmp.ge.s32.totalorder %s36, 3
      %s38 = scalar_select %p37, 0, %s36
      %s39 = sadd.s32 1, %s30
      %s40 = scalar_select %p37, %s39, %s30
      %p41 = scmp.ge.s32.totalorder %s40, 2
      %s42 = scalar_select %p41, 0, %s40
      %s43 = ssub.s32 %s30, %s42
      %s44 = ssub.s32 %s31, %s38
      %s45 = sor.u32 %s43, %s44
      %p46 = scmp.eq.s32.totalorder %s45, 0
      %s48 = sadd.s32 %s47, 1
      %s49 = scalar_select %p46, %s47, %s48
      %p52 = pneg %p46
      %p53 = scmp.eq.s32.totalorder %s23, 5
      %p54 = por %p52, %p53
      %p55 = scmp.ne.s32.totalorder %s47, %s50
      %p56 = scmp.eq.s32.totalorder %s23, 0
      %p57 = por %p55, %p56
      %p58 = scmp.ne.s32.totalorder %s47, %s50
      %p59 = scmp.eq.s32.totalorder %s28, 5
      %p60 = por %p58, %p59
      %p61 = scmp.ne.s32.totalorder %s50, %s51
      %p62 = scmp.eq.s32.totalorder %s28, 0
      %p63 = por %p61, %p62
      %p64 = scmp.ne.s32.totalorder %s50, %s51
      %p65 = scmp.eq.s32.totalorder %s29, 5
      %p66 = por %p64, %p65
      %p68 = scmp.ne.s32.totalorder %s51, %s67
      %p69 = scmp.eq.s32.totalorder %s29, 0
      %p70 = por %p68, %p69
      %s72 = sadd.s32 %s71, 1
      %p75 = scmp.eq.s32.totalorder %s23, 5
      %p76 = scmp.ne.s32.totalorder %s71, %s73
      %p77 = scmp.eq.s32.totalorder %s23, 0
      %p78 = por %p76, %p77
      %p79 = scmp.ne.s32.totalorder %s71, %s73
      %p80 = scmp.eq.s32.totalorder %s28, 5
      %p81 = por %p79, %p80
      %p82 = scmp.ne.s32.totalorder %s73, %s74
      %p83 = scmp.eq.s32.totalorder %s28, 0
      %p84 = por %p82, %p83
      %p85 = scmp.ne.s32.totalorder %s73, %s74
      %p86 = scmp.eq.s32.totalorder %s29, 5
      %p87 = por %p85, %p86
      %p89 = scmp.ne.s32.totalorder %s74, %s88
      %p90 = scmp.eq.s32.totalorder %s29, 0
      %p91 = por %p89, %p90
      %s93 = sadd.s32 %s92, 1
      %p96 = scmp.eq.s32.totalorder %s23, 5
      %p97 = scmp.ne.s32.totalorder %s92, %s94
      %p98 = scmp.eq.s32.totalorder %s23, 0
      %p99 = por %p97, %p98
      %p100 = scmp.ne.s32.totalorder %s92, %s94
      %p101 = scmp.eq.s32.totalorder %s28, 5
      %p102 = por %p100, %p101
      %p103 = scmp.ne.s32.totalorder %s94, %s95
      %p104 = scmp.eq.s32.totalorder %s28, 0
      %p105 = por %p103, %p104
      %p106 = scmp.ne.s32.totalorder %s94, %s95
      %p107 = scmp.eq.s32.totalorder %s29, 5
      %p108 = por %p106, %p107
      %p110 = scmp.ne.s32.totalorder %s95, %s109
      %p111 = scmp.eq.s32.totalorder %s29, 0
      %p112 = por %p110, %p111
      %s114 = sadd.s32 %s113, 1
      %p117 = scmp.eq.s32.totalorder %s23, 5
      %p118 = scmp.ne.s32.totalorder %s113, %s115
      %p119 = scmp.eq.s32.totalorder %s23, 0
      %p120 = por %p118, %p119
      %p121 = scmp.ne.s32.totalorder %s113, %s115
      %p122 = scmp.eq.s32.totalorder %s28, 5
      %p123 = por %p121, %p122
      %p124 = scmp.ne.s32.totalorder %s115, %s116
      %p125 = scmp.eq.s32.totalorder %s28, 0
      %p126 = por %p124, %p125
      %p127 = scmp.ne.s32.totalorder %s115, %s116
      %p128 = scmp.eq.s32.totalorder %s29, 5
      %p129 = por %p127, %p128
      %p131 = scmp.ne.s32.totalorder %s116, %s130
      %p132 = scmp.eq.s32.totalorder %s29, 0
      %p133 = por %p131, %p132
      %s135 = sadd.s32 %s134, 1
      %p138 = scmp.eq.s32.totalorder %s23, 5
      %p139 = scmp.ne.s32.totalorder %s134, %s136
      %p140 = scmp.eq.s32.totalorder %s23, 0
      %p141 = por %p139, %p140
      %p142 = scmp.ne.s32.totalorder %s134, %s136
      %p143 = scmp.eq.s32.totalorder %s28, 5
      %p144 = por %p142, %p143
      %p145 = scmp.ne.s32.totalorder %s136, %s137
      %p146 = scmp.eq.s32.totalorder %s28, 0
      %p147 = por %p145, %p146
      %p148 = scmp.ne.s32.totalorder %s136, %s137
      %p149 = scmp.eq.s32.totalorder %s29, 5
      %p150 = por %p148, %p149
      %p152 = scmp.ne.s32.totalorder %s137, %s151
      %p153 = scmp.eq.s32.totalorder %s29, 0
      %p154 = por %p152, %p153
      %s156 = sadd.s32 %s155, 1
      %p159 = scmp.eq.s32.totalorder %s23, 5
      %p160 = scmp.ne.s32.totalorder %s155, %s157
      %p161 = scmp.eq.s32.totalorder %s23, 0
      %p162 = por %p160, %p161
      %p163 = scmp.ne.s32.totalorder %s155, %s157
      %p164 = scmp.eq.s32.totalorder %s28, 5
      %p165 = por %p163, %p164
      %p166 = scmp.ne.s32.totalorder %s157, %s158
      %p167 = scmp.eq.s32.totalorder %s28, 0
      %p168 = por %p166, %p167
      %p169 = scmp.ne.s32.totalorder %s157, %s158
      %p170 = scmp.eq.s32.totalorder %s29, 5
      %p171 = por %p169, %p170
      %p173 = scmp.ne.s32.totalorder %s158, %s172
      %p174 = scmp.eq.s32.totalorder %s29, 0
      %p175 = por %p173, %p174
      %s177 = sadd.s32 %s176, 1
      %p180 = scmp.eq.s32.totalorder %s23, 5
      %p181 = scmp.ne.s32.totalorder %s176, %s178
      %p182 = scmp.eq.s32.totalorder %s23, 0
      %p183 = por %p181, %p182
      %p184 = scmp.ne.s32.totalorder %s176, %s178
      %p185 = scmp.eq.s32.totalorder %s28, 5
      %p186 = por %p184, %p185
      %p187 = scmp.ne.s32.totalorder %s178, %s179
      %p188 = scmp.eq.s32.totalorder %s28, 0
      %p189 = por %p187, %p188
      %p190 = scmp.ne.s32.totalorder %s178, %s179
      %p191 = scmp.eq.s32.totalorder %s29, 5
      %p192 = por %p190, %p191
      %p194 = scmp.ne.s32.totalorder %s179, %s193
      %p195 = scmp.eq.s32.totalorder %s29, 0
      %p196 = por %p194, %p195
      %s198 = sadd.s32 %s197, 1
      %p201 = scmp.eq.s32.totalorder %s23, 5
      %p202 = scmp.ne.s32.totalorder %s197, %s199
      %p203 = scmp.eq.s32.totalorder %s23, 0
      %p204 = por %p202, %p203
      %p205 = scmp.ne.s32.totalorder %s197, %s199
      %p206 = scmp.eq.s32.totalorder %s28, 5
      %p207 = por %p205, %p206
      %p208 = scmp.ne.s32.totalorder %s199, %s200
      %p209 = scmp.eq.s32.totalorder %s28, 0
      %p210 = por %p208, %p209
      %p211 = scmp.ne.s32.totalorder %s199, %s200
      %p212 = scmp.eq.s32.totalorder %s29, 5
      %p213 = por %p211, %p212
      %p215 = scmp.ne.s32.totalorder %s200, %s214
      %p216 = scmp.eq.s32.totalorder %s29, 0
      %p217 = por %p215, %p216
      %s219 = sadd.s32 %s218, 1
      %p222 = scmp.eq.s32.totalorder %s23, 5
      %p223 = scmp.ne.s32.totalorder %s218, %s220
      %p224 = scmp.eq.s32.totalorder %s23, 0
      %p225 = por %p223, %p224
      %p226 = scmp.ne.s32.totalorder %s218, %s220
      %p227 = scmp.eq.s32.totalorder %s28, 5
      %p228 = por %p226, %p227
      %p229 = scmp.ne.s32.totalorder %s220, %s221
      %p230 = scmp.eq.s32.totalorder %s28, 0
      %p231 = por %p229, %p230
      %p232 = scmp.ne.s32.totalorder %s220, %s221
      %p233 = scmp.eq.s32.totalorder %s29, 5
      %p234 = por %p232, %p233
      %p236 = scmp.ne.s32.totalorder %s221, %s235
      %p237 = scmp.eq.s32.totalorder %s29, 0
      %p238 = por %p236, %p237
      %s239 = ssub.s32 %s30, %s42
      %s240 = ssub.s32 %s31, %s38
      %s241 = sor.u32 %s239, %s240
      %p242 = scmp.eq.s32.totalorder %s241, 0
      %s244 = sadd.s32 %s243, 1
      %s245 = scalar_select %p242, %s243, %s244
      %p248 = pneg %p242
      %p249 = scmp.eq.s32.totalorder %s23, 5
      %p250 = por %p248, %p249
      %p251 = scmp.ne.s32.totalorder %s243, %s246
      %p252 = scmp.eq.s32.totalorder %s23, 0
      %p253 = por %p251, %p252
      %p254 = scmp.ne.s32.totalorder %s243, %s246
      %p255 = scmp.eq.s32.totalorder %s28, 5
      %p256 = por %p254, %p255
      %p257 = scmp.ne.s32.totalorder %s246, %s247
      %p258 = scmp.eq.s32.totalorder %s28, 0
      %p259 = por %p257, %p258
      %p260 = scmp.ne.s32.totalorder %s246, %s247
      %p261 = scmp.eq.s32.totalorder %s29, 5
      %p262 = por %p260, %p261
      %p264 = scmp.ne.s32.totalorder %s247, %s263
      %p265 = scmp.eq.s32.totalorder %s29, 0
      %p266 = por %p264, %p265
      %p267 = scmp.le.s32.totalorder 1, %s23
      %p268 = scmp.lt.s32.totalorder %s23, 7
      %p269 = pnand %p267, %p268
      %p270 = pneg %p269
      // Predicated region
      $region9: #{tpu_custom_call.1} parent=5 // pred_check
        _
      $region10: #{tpu_custom_call.1} parent=5 // pred_check_branch
        %272 = sbr.rel (%p269) target = $region12
      $region11: #{tpu_custom_call.1} parent=5 // pred_region
        %s273 = ssub.s32 %s23, 1
        // Predicated region
        $region13: #{tpu_custom_call.1} parent=11 // pred_check
          %p274 = pneg %p84
        $region14: #{tpu_custom_call.1} parent=11 // pred_check_branch
          %276 = sbr.rel (%p274) target = $region16
        $region15: #{tpu_custom_call.1} parent=11 // pred_region
          _
        $region16: #{tpu_custom_call.1} parent=11 // pred_fallthru
          _
        // Predicated region
        $region17: #{tpu_custom_call.1} parent=11 // pred_check
          %p277 = pneg %p105
        $region18: #{tpu_custom_call.1} parent=11 // pred_check_branch
          %279 = sbr.rel (%p277) target = $region20
        $region19: #{tpu_custom_call.1} parent=11 // pred_region
          _
        $region20: #{tpu_custom_call.1} parent=11 // pred_fallthru
          _
        // Predicated region
        $region21: #{tpu_custom_call.1} parent=11 // pred_check
          %p280 = pneg %p126
        $region22: #{tpu_custom_call.1} parent=11 // pred_check_branch
          %282 = sbr.rel (%p280) target = $region24
        $region23: #{tpu_custom_call.1} parent=11 // pred_region
          _
        $region24: #{tpu_custom_call.1} parent=11 // pred_fallthru
          _
        // Predicated region
        $region25: #{tpu_custom_call.1} parent=11 // pred_check
          %p283 = pneg %p147
        $region26: #{tpu_custom_call.1} parent=11 // pred_check_branch
          %285 = sbr.rel (%p283) target = $region28
        $region27: #{tpu_custom_call.1} parent=11 // pred_region
          _
        $region28: #{tpu_custom_call.1} parent=11 // pred_fallthru
          _
        // Predicated region
        $region29: #{tpu_custom_call.1} parent=11 // pred_check
          %p286 = pneg %p168
        $region30: #{tpu_custom_call.1} parent=11 // pred_check_branch
          %288 = sbr.rel (%p286) target = $region32
        $region31: #{tpu_custom_call.1} parent=11 // pred_region
          _
        $region32: #{tpu_custom_call.1} parent=11 // pred_fallthru
          _
        // Predicated region
        $region33: #{tpu_custom_call.1} parent=11 // pred_check
          %p289 = pneg %p189
        $region34: #{tpu_custom_call.1} parent=11 // pred_check_branch
          %291 = sbr.rel (%p289) target = $region36
        $region35: #{tpu_custom_call.1} parent=11 // pred_region
          _
        $region36: #{tpu_custom_call.1} parent=11 // pred_fallthru
          _
        // Predicated region
        $region37: #{tpu_custom_call.1} parent=11 // pred_check
          %p292 = pneg %p210
        $region38: #{tpu_custom_call.1} parent=11 // pred_check_branch
          %294 = sbr.rel (%p292) target = $region40
        $region39: #{tpu_custom_call.1} parent=11 // pred_region
          _
        $region40: #{tpu_custom_call.1} parent=11 // pred_fallthru
          _
        // Predicated region
        $region41: #{tpu_custom_call.1} parent=11 // pred_check
          %p295 = pneg %p231
        $region42: #{tpu_custom_call.1} parent=11 // pred_check_branch
          %297 = sbr.rel (%p295) target = $region44
        $region43: #{tpu_custom_call.1} parent=11 // pred_region
          _
        $region44: #{tpu_custom_call.1} parent=11 // pred_fallthru
          _
      $region12: #{tpu_custom_call.1} parent=5 // pred_fallthru
        _
      %p298 = scmp.lt.s32.totalorder %s23, 6
      // Predicated region
      $region45: #{tpu_custom_call.1} parent=5 // pred_check
        %p299 = pneg %p298
      $region46: #{tpu_custom_call.1} parent=5 // pred_check_branch
        %301 = sbr.rel (%p299) target = $region48
      $region47: #{tpu_custom_call.1} parent=5 // pred_region
        // Predicated region
        $region49: #{tpu_custom_call.1} parent=47 // pred_check
          %p302 = pneg %p57
        $region50: #{tpu_custom_call.1} parent=47 // pred_check_branch
          %304 = sbr.rel (%p302) target = $region52
        $region51: #{tpu_custom_call.1} parent=47 // pred_region
          %s305 = sand.u32 %s47, 1
          %s306 = scalar_lea.sflag [#allocation8], %s305
          %s307 = sand.u32 %s47, 1
          %s308 = smul.addr %s307, 16
          %s309 = scalar_lea.vmem [#allocation7], %s308
          %s310 = smul.u32 2, %s30
          %s312 = ssub.s32 256, 256
          %313 = vsyncadd %s306, %s312
          %s314 = smul.addr %s310, 3
          %s315 = sadd.s32 %s31, %s314
          %s316 = smul.addr %s315, 128
          %s317 = scalar_lea.hbm %s0, %s316
          %s318 = sshll.u32 %s309, 4
          %s319 = int_to_ptr.vmem [resolvable:$true] %s318
          %324 = dma.hbm_to_vmem [thread:$0]  %s317, 256, %s319, %s306, 384, 128, 8
        $region52: #{tpu_custom_call.1} parent=47 // pred_fallthru
          _
      $region48: #{tpu_custom_call.1} parent=5 // pred_fallthru
        _
      %p325 = scmp.le.s32.totalorder 1, %s23
      %p326 = scmp.lt.s32.totalorder %s23, 7
      %p327 = pnand %p325, %p326
      %p328 = pneg %p327
      // Predicated region
      $region53: #{tpu_custom_call.1} parent=5 // pred_check
        _
      $region54: #{tpu_custom_call.1} parent=5 // pred_check_branch
        %330 = sbr.rel (%p327) target = $region56
      $region55: #{tpu_custom_call.1} parent=5 // pred_region
        %s331 = ssub.s32 %s23, 1
        %s332 = sand.u32 %s50, 1
        %s333 = scalar_lea.sflag [#allocation8], %s332
        %s334 = sand.u32 %s50, 1
        %s335 = smul.addr %s334, 16
        %s336 = scalar_lea.vmem [#allocation7], %s335
        // Predicated region
        $region57: #{tpu_custom_call.1} parent=55 // pred_check
          %p337 = pneg %p63
        $region58: #{tpu_custom_call.1} parent=55 // pred_check_branch
          %339 = sbr.rel (%p337) target = $region60
        $region59: #{tpu_custom_call.1} parent=55 // pred_region
          %340 = dma.done %s333, 256
        $region60: #{tpu_custom_call.1} parent=55 // pred_fallthru
          _
        %s341 = sand.u32 %s50, 1
        %s342 = scalar_lea.sflag [#allocation8], %s341
        %s343 = sand.u32 %s50, 1
        %s344 = smul.addr %s343, 16
        %s345 = scalar_lea.vmem [#allocation7], %s344
        %p346 = pneg %p63
        %p347 = pneg %p60
        %p348 = pneg %p84
        %p349 = pneg %p81
        %p350 = pneg %p105
        %p351 = pneg %p102
        %p352 = pneg %p126
        %p353 = pneg %p123
        %p354 = pneg %p147
        %p355 = pneg %p144
        %p356 = pneg %p168
        %p357 = pneg %p165
        %p358 = pneg %p189
        %p359 = pneg %p186
        %p360 = pneg %p210
        %p361 = pneg %p207
        %p362 = pneg %p231
        %p363 = pneg %p228
        %p364 = pneg %p259
        %p365 = pneg %p256
        %s366 = sand.u32 %s246, 1
        %s367 = scalar_lea.sflag [#allocation9], %s366
        %s368 = sand.u32 %s246, 1
        %s369 = smul.addr %s368, 16
        %s370 = scalar_lea.vmem [#allocation10], %s369
        %s371 = smul.u32 2, %s32
        %s372 = smul.u32 2, %s32
        %p373 = scmp.eq.s32.totalorder %s33, 0
        // Predicated region
        $region61: #{tpu_custom_call.1} parent=55 // pred_check
          %p374 = pneg %p373
        $region62: #{tpu_custom_call.1} parent=55 // pred_check_branch
          %376 = sbr.rel (%p374) target = $region64
        $region63: #{tpu_custom_call.1} parent=55 // pred_region
          %vm377 = vcmask 253952
          %378 = vst.msk [vmem:[#allocation2] sm:$0x1] %vm377, 0.0
        $region64: #{tpu_custom_call.1} parent=55 // pred_fallthru
          _
        %v379 = vld [vmem:[%s336] sm:$0xff]
        %v380 = vld [vmem:[%s1] sm:$0xff]
        %v381 = vld [vmem:[%s1 + $0x8] sm:$0xff]
        %v382 = vld [vmem:[%s1 + $0x10] sm:$0xff]
        %v383 = vld [vmem:[%s1 + $0x18] sm:$0xff]
        %v384 = vld [vmem:[#allocation6] sm:$0x1]
        %v386 = vlaneseq
        %v387 = vshrl.u32 %v386, 7
        %v388 = vsub.s32 0, %v387
        %v389 = vrot.slane %v384, %v388
        %vm391 = vcmask 261120
        %v393 = vsel %vm391, %v379, 0
        %395 = vmatprep.subr.mxu0 0.0
        %396 = vmatpush1.msra.mxu0 %v380
        %397 = vmatprep.subr.mxu0 0.0
        %398 = vmatpush1.msra.mxu0 %v381
        %399 = vmatprep.subr.mxu0 0.0
        %400 = vmatpush1.msra.mxu0 %v382
        %401 = vmatprep.subr.mxu0 0.0
        %402 = vmatpush1.msra.mxu0 %v383
        %403 = vmatprep.subr.mxu0 0.0
        %404 = vmatpush1.msra.mxu0 0.0
        %405 = vmatprep.subr.mxu0 0.0
        %406 = vmatpush1.msra.mxu0 0.0
        %407 = vmatprep.subr.mxu0 0.0
        %408 = vmatpush1.msra.mxu0 0.0
        %409 = vmatprep.subr.mxu0 0.0
        %410 = vmatpush1.msra.mxu0 0.0
        %411 = vmatprep.subr.mxu0 0.0
        %412 = vmatpush1.msra.mxu0 0.0
        %413 = vmatprep.subr.mxu0 0.0
        %414 = vmatpush1.msra.mxu0 0.0
        %415 = vmatprep.subr.mxu0 0.0
        %416 = vmatpush1.msra.mxu0 0.0
        %417 = vmatprep.subr.mxu0 0.0
        %418 = vmatpush1.msra.mxu0 0.0
        %419 = vmatprep.subr.mxu0 0.0
        %420 = vmatpush1.msra.mxu0 0.0
        %421 = vmatprep.subr.mxu0 0.0
        %422 = vmatpush1.msra.mxu0 0.0
        %423 = vmatprep.subr.mxu0 0.0
        %424 = vmatpush1.msra.mxu0 0.0
        %425 = vmatprep.subr.mxu0 0.0
        %426 = vmatpush1.msra.mxu0 0.0
        %427 = vmatprep.subr.mxu0 0.0
        %428 = vmatpush1.msra.mxu0 0.0
        %429 = vmatprep.subr.mxu0 0.0
        %430 = vmatpush1.msra.mxu0 0.0
        %431 = vmatprep.subr.mxu0 0.0
        %432 = vmatpush1.msra.mxu0 0.0
        %433 = vmatprep.subr.mxu0 0.0
        %434 = vmatpush1.msra.mxu0 0.0
        %435 = vmatprep.subr.mxu0 0.0
        %436 = vmatpush1.msra.mxu0 0.0
        %437 = vmatprep.subr.mxu0 0.0
        %438 = vmatpush1.msra.mxu0 0.0
        %439 = vmatprep.subr.mxu0 0.0
        %440 = vmatpush1.msra.mxu0 0.0
        %441 = vmatprep.subr.mxu0 0.0
        %442 = vmatpush1.msra.mxu0 0.0
        %443 = vmatprep.subr.mxu0 0.0
        %444 = vmatpush1.msra.mxu0 0.0
        %445 = vmatprep.subr.mxu0 0.0
        %446 = vmatpush1.msra.mxu0 0.0
        %447 = vmatprep.subr.mxu0 0.0
        %448 = vmatpush1.msra.mxu0 0.0
        %449 = vmatprep.subr.mxu0 0.0
        %450 = vmatpush1.msra.mxu0 0.0
        %451 = vmatprep.subr.mxu0 0.0
        %452 = vmatpush1.msra.mxu0 0.0
        %453 = vmatprep.subr.mxu0 0.0
        %454 = vmatpush1.msra.mxu0 0.0
        %455 = vmatprep.subr.mxu0 0.0
        %456 = vmatpush1.msra.mxu0 0.0
        %457 = vmatprep.subr.mxu0 0.0
        %458 = vmatpush1.msra.mxu0 0.0
        %459 = vmatprep.mubr.f32.mxu0 0.0
        %460 = vmatmul.mubr.f32.gmra.mrb[0].mxu0 %v393
        %v461 = vpop.f32.mrb[0].mxu0
        %v462 = vadd.f32 %v389, %v461
        %v463 = vpop.f32.mrb[0].mxu0
        %464 = vdwg.mxu0
        %v465 = vxor.u32 %v462, 2147483648
        %v466 = vmul.f32 %v465, 1.442695
        %v467 = vpow.pop %v466
        %v468 = vadd.f32 %v467, 1.0
        %v469 = vrcp.pop %v468
        %v470 = vmul.f32 1.0, %v469
        %v471 = vmul.f32 %v470, 0.99
        %v472 = vadd.f32 %v471, 0.01
        %v473 = vld [vmem:[%s5] sm:$0x1]
        %v475 = vlaneseq
        %v476 = vshrl.u32 %v475, 7
        %v477 = vsub.s32 0, %v476
        %v478 = vrot.slane %v473, %v477
        %481 = vset.pattern.permute.xlu0 0
        %482 = vperm.xlu0 %481, %v472
        %v483 = vpop.permute.xlu0 %482
        %v485 = vmul.f32 %v478, %v483
        %v486 = vmul.f32 %v485, 1.442695
        %v487 = vpow.pop %v486
        %vm488 = vcmask 130048
        %489 = vst.msk [vmem:[#allocation3] sm:$0xff] %vm488, %v487
        %v490 = vld [vmem:[%s3] sm:$0xff]
        %v491 = vld [vmem:[%s3 + $0x8] sm:$0xff]
        %v492 = vld [vmem:[%s3 + $0x10] sm:$0xff]
        %v493 = vld [vmem:[%s3 + $0x18] sm:$0xff]
        %v494 = vld [vmem:[%s4] sm:$0x1]
        %v496 = vlaneseq
        %v497 = vshrl.u32 %v496, 7
        %v498 = vsub.s32 0, %v497
        %v499 = vrot.slane %v494, %v498
        %501 = vmatprep.subr.mxu0 0.0
        %502 = vmatpush1.msra.mxu0 %v490
        %503 = vmatprep.subr.mxu0 0.0
        %504 = vmatpush1.msra.mxu0 %v491
        %505 = vmatprep.subr.mxu0 0.0
        %506 = vmatpush1.msra.mxu0 %v492
        %507 = vmatprep.subr.mxu0 0.0
        %508 = vmatpush1.msra.mxu0 %v493
        %509 = vmatprep.subr.mxu0 0.0
        %510 = vmatpush1.msra.mxu0 0.0
        %511 = vmatprep.subr.mxu0 0.0
        %512 = vmatpush1.msra.mxu0 0.0
        %513 = vmatprep.subr.mxu0 0.0
        %514 = vmatpush1.msra.mxu0 0.0
        %515 = vmatprep.subr.mxu0 0.0
        %516 = vmatpush1.msra.mxu0 0.0
        %517 = vmatprep.subr.mxu0 0.0
        %518 = vmatpush1.msra.mxu0 0.0
        %519 = vmatprep.subr.mxu0 0.0
        %520 = vmatpush1.msra.mxu0 0.0
        %521 = vmatprep.subr.mxu0 0.0
        %522 = vmatpush1.msra.mxu0 0.0
        %523 = vmatprep.subr.mxu0 0.0
        %524 = vmatpush1.msra.mxu0 0.0
        %525 = vmatprep.subr.mxu0 0.0
        %526 = vmatpush1.msra.mxu0 0.0
        %527 = vmatprep.subr.mxu0 0.0
        %528 = vmatpush1.msra.mxu0 0.0
        %529 = vmatprep.subr.mxu0 0.0
        %530 = vmatpush1.msra.mxu0 0.0
        %531 = vmatprep.subr.mxu0 0.0
        %532 = vmatpush1.msra.mxu0 0.0
        %533 = vmatprep.subr.mxu0 0.0
        %534 = vmatpush1.msra.mxu0 0.0
        %535 = vmatprep.subr.mxu0 0.0
        %536 = vmatpush1.msra.mxu0 0.0
        %537 = vmatprep.subr.mxu0 0.0
        %538 = vmatpush1.msra.mxu0 0.0
        %539 = vmatprep.subr.mxu0 0.0
        %540 = vmatpush1.msra.mxu0 0.0
        %541 = vmatprep.subr.mxu0 0.0
        %542 = vmatpush1.msra.mxu0 0.0
        %543 = vmatprep.subr.mxu0 0.0
        %544 = vmatpush1.msra.mxu0 0.0
        %545 = vmatprep.subr.mxu0 0.0
        %546 = vmatpush1.msra.mxu0 0.0
        %547 = vmatprep.subr.mxu0 0.0
        %548 = vmatpush1.msra.mxu0 0.0
        %549 = vmatprep.subr.mxu0 0.0
        %550 = vmatpush1.msra.mxu0 0.0
        %551 = vmatprep.subr.mxu0 0.0
        %552 = vmatpush1.msra.mxu0 0.0
        %553 = vmatprep.subr.mxu0 0.0
        %554 = vmatpush1.msra.mxu0 0.0
        %555 = vmatprep.subr.mxu0 0.0
        %556 = vmatpush1.msra.mxu0 0.0
        %557 = vmatprep.subr.mxu0 0.0
        %558 = vmatpush1.msra.mxu0 0.0
        %559 = vmatprep.subr.mxu0 0.0
        %560 = vmatpush1.msra.mxu0 0.0
        %561 = vmatprep.subr.mxu0 0.0
        %562 = vmatpush1.msra.mxu0 0.0
        %563 = vmatprep.subr.mxu0 0.0
        %564 = vmatpush1.msra.mxu0 0.0
        %565 = vmatprep.mubr.f32.mxu0 0.0
        %566 = vmatmul.mubr.f32.gmra.mrb[0].mxu0 %v393
        %v567 = vpop.f32.mrb[0].mxu0
        %v568 = vadd.f32 %v499, %v567
        %v569 = vpop.f32.mrb[0].mxu0
        %570 = vdwg.mxu0
        %571 = vst.msk [vmem:[#allocation4] sm:$0xff] %vm488, %v568
        %v572 = vld [vmem:[%s7] sm:$0xff]
        %v573 = vld [vmem:[%s7 + $0x8] sm:$0xff]
        %v574 = vld [vmem:[%s7 + $0x10] sm:$0xff]
        %v575 = vld [vmem:[%s7 + $0x18] sm:$0xff]
        %v576 = vld [vmem:[%s8] sm:$0x1]
        %v578 = vlaneseq
        %v579 = vshrl.u32 %v578, 7
        %v580 = vsub.s32 0, %v579
        %v581 = vrot.slane %v576, %v580
        %583 = vmatprep.subr.mxu0 0.0
        %584 = vmatpush1.msra.mxu0 %v572
        %585 = vmatprep.subr.mxu0 0.0
        %586 = vmatpush1.msra.mxu0 %v573
        %587 = vmatprep.subr.mxu0 0.0
        %588 = vmatpush1.msra.mxu0 %v574
        %589 = vmatprep.subr.mxu0 0.0
        %590 = vmatpush1.msra.mxu0 %v575
        %591 = vmatprep.subr.mxu0 0.0
        %592 = vmatpush1.msra.mxu0 0.0
        %593 = vmatprep.subr.mxu0 0.0
        %594 = vmatpush1.msra.mxu0 0.0
        %595 = vmatprep.subr.mxu0 0.0
        %596 = vmatpush1.msra.mxu0 0.0
        %597 = vmatprep.subr.mxu0 0.0
        %598 = vmatpush1.msra.mxu0 0.0
        %599 = vmatprep.subr.mxu0 0.0
        %600 = vmatpush1.msra.mxu0 0.0
        %601 = vmatprep.subr.mxu0 0.0
        %602 = vmatpush1.msra.mxu0 0.0
        %603 = vmatprep.subr.mxu0 0.0
        %604 = vmatpush1.msra.mxu0 0.0
        %605 = vmatprep.subr.mxu0 0.0
        %606 = vmatpush1.msra.mxu0 0.0
        %607 = vmatprep.subr.mxu0 0.0
        %608 = vmatpush1.msra.mxu0 0.0
        %609 = vmatprep.subr.mxu0 0.0
        %610 = vmatpush1.msra.mxu0 0.0
        %611 = vmatprep.subr.mxu0 0.0
        %612 = vmatpush1.msra.mxu0 0.0
        %613 = vmatprep.subr.mxu0 0.0
        %614 = vmatpush1.msra.mxu0 0.0
        %615 = vmatprep.subr.mxu0 0.0
        %616 = vmatpush1.msra.mxu0 0.0
        %617 = vmatprep.subr.mxu0 0.0
        %618 = vmatpush1.msra.mxu0 0.0
        %619 = vmatprep.subr.mxu0 0.0
        %620 = vmatpush1.msra.mxu0 0.0
        %621 = vmatprep.subr.mxu0 0.0
        %622 = vmatpush1.msra.mxu0 0.0
        %623 = vmatprep.subr.mxu0 0.0
        %624 = vmatpush1.msra.mxu0 0.0
        %625 = vmatprep.subr.mxu0 0.0
        %626 = vmatpush1.msra.mxu0 0.0
        %627 = vmatprep.subr.mxu0 0.0
        %628 = vmatpush1.msra.mxu0 0.0
        %629 = vmatprep.subr.mxu0 0.0
        %630 = vmatpush1.msra.mxu0 0.0
        %631 = vmatprep.subr.mxu0 0.0
        %632 = vmatpush1.msra.mxu0 0.0
        %633 = vmatprep.subr.mxu0 0.0
        %634 = vmatpush1.msra.mxu0 0.0
        %635 = vmatprep.subr.mxu0 0.0
        %636 = vmatpush1.msra.mxu0 0.0
        %637 = vmatprep.subr.mxu0 0.0
        %638 = vmatpush1.msra.mxu0 0.0
        %639 = vmatprep.subr.mxu0 0.0
        %640 = vmatpush1.msra.mxu0 0.0
        %641 = vmatprep.subr.mxu0 0.0
        %642 = vmatpush1.msra.mxu0 0.0
        %643 = vmatprep.subr.mxu0 0.0
        %644 = vmatpush1.msra.mxu0 0.0
        %645 = vmatprep.subr.mxu0 0.0
        %646 = vmatpush1.msra.mxu0 0.0
        %647 = vmatprep.mubr.f32.mxu0 0.0
        %648 = vmatmul.mubr.f32.gmra.mrb[0].mxu0 %v393
        %v649 = vpop.f32.mrb[0].mxu0
        %v650 = vadd.f32 %v581, %v649
        %v651 = vpop.f32.mrb[0].mxu0
        %652 = vdwg.mxu0
        %653 = vst.msk [vmem:[%s370] sm:$0xff] %vm391, %v650
        %s654 = scalar_lea.vmem %s336, 8 [#allocation7]
        %v655 = vld [vmem:[%s654] sm:$0xff]
        %v656 = vld [vmem:[%s1] sm:$0xff]
        %v657 = vld [vmem:[%s1 + $0x8] sm:$0xff]
        %v658 = vld [vmem:[%s1 + $0x10] sm:$0xff]
        %v659 = vld [vmem:[%s1 + $0x18] sm:$0xff]
        %v660 = vld [vmem:[#allocation6] sm:$0x1]
        %v662 = vlaneseq
        %v663 = vshrl.u32 %v662, 7
        %v664 = vsub.s32 0, %v663
        %v665 = vrot.slane %v660, %v664
        %v668 = vsel %vm391, %v655, 0
        %670 = vmatprep.subr.mxu0 0.0
        %671 = vmatpush1.msra.mxu0 %v656
        %672 = vmatprep.subr.mxu0 0.0
        %673 = vmatpush1.msra.mxu0 %v657
        %674 = vmatprep.subr.mxu0 0.0
        %675 = vmatpush1.msra.mxu0 %v658
        %676 = vmatprep.subr.mxu0 0.0
        %677 = vmatpush1.msra.mxu0 %v659
        %678 = vmatprep.subr.mxu0 0.0
        %679 = vmatpush1.msra.mxu0 0.0
        %680 = vmatprep.subr.mxu0 0.0
        %681 = vmatpush1.msra.mxu0 0.0
        %682 = vmatprep.subr.mxu0 0.0
        %683 = vmatpush1.msra.mxu0 0.0
        %684 = vmatprep.subr.mxu0 0.0
        %685 = vmatpush1.msra.mxu0 0.0
        %686 = vmatprep.subr.mxu0 0.0
        %687 = vmatpush1.msra.mxu0 0.0
        %688 = vmatprep.subr.mxu0 0.0
        %689 = vmatpush1.msra.mxu0 0.0
        %690 = vmatprep.subr.mxu0 0.0
        %691 = vmatpush1.msra.mxu0 0.0
        %692 = vmatprep.subr.mxu0 0.0
        %693 = vmatpush1.msra.mxu0 0.0
        %694 = vmatprep.subr.mxu0 0.0
        %695 = vmatpush1.msra.mxu0 0.0
        %696 = vmatprep.subr.mxu0 0.0
        %697 = vmatpush1.msra.mxu0 0.0
        %698 = vmatprep.subr.mxu0 0.0
        %699 = vmatpush1.msra.mxu0 0.0
        %700 = vmatprep.subr.mxu0 0.0
        %701 = vmatpush1.msra.mxu0 0.0
        %702 = vmatprep.subr.mxu0 0.0
        %703 = vmatpush1.msra.mxu0 0.0
        %704 = vmatprep.subr.mxu0 0.0
        %705 = vmatpush1.msra.mxu0 0.0
        %706 = vmatprep.subr.mxu0 0.0
        %707 = vmatpush1.msra.mxu0 0.0
        %708 = vmatprep.subr.mxu0 0.0
        %709 = vmatpush1.msra.mxu0 0.0
        %710 = vmatprep.subr.mxu0 0.0
        %711 = vmatpush1.msra.mxu0 0.0
        %712 = vmatprep.subr.mxu0 0.0
        %713 = vmatpush1.msra.mxu0 0.0
        %714 = vmatprep.subr.mxu0 0.0
        %715 = vmatpush1.msra.mxu0 0.0
        %716 = vmatprep.subr.mxu0 0.0
        %717 = vmatpush1.msra.mxu0 0.0
        %718 = vmatprep.subr.mxu0 0.0
        %719 = vmatpush1.msra.mxu0 0.0
        %720 = vmatprep.subr.mxu0 0.0
        %721 = vmatpush1.msra.mxu0 0.0
        %722 = vmatprep.subr.mxu0 0.0
        %723 = vmatpush1.msra.mxu0 0.0
        %724 = vmatprep.subr.mxu0 0.0
        %725 = vmatpush1.msra.mxu0 0.0
        %726 = vmatprep.subr.mxu0 0.0
        %727 = vmatpush1.msra.mxu0 0.0
        %728 = vmatprep.subr.mxu0 0.0
        %729 = vmatpush1.msra.mxu0 0.0
        %730 = vmatprep.subr.mxu0 0.0
        %731 = vmatpush1.msra.mxu0 0.0
        %732 = vmatprep.subr.mxu0 0.0
        %733 = vmatpush1.msra.mxu0 0.0
        %734 = vmatprep.mubr.f32.mxu0 0.0
        %735 = vmatmul.mubr.f32.gmra.mrb[0].mxu0 %v668
        %v736 = vpop.f32.mrb[0].mxu0
        %v737 = vadd.f32 %v665, %v736
        %v738 = vpop.f32.mrb[0].mxu0
        %739 = vdwg.mxu0
        %v740 = vxor.u32 %v737, 2147483648
        %v741 = vmul.f32 %v740, 1.442695
        %v742 = vpow.pop %v741
        %v743 = vadd.f32 %v742, 1.0
        %v744 = vrcp.pop %v743
        %v745 = vmul.f32 1.0, %v744
        %v746 = vmul.f32 %v745, 0.99
        %v747 = vadd.f32 %v746, 0.01
        %v748 = vld [vmem:[%s5] sm:$0x1]
        %v750 = vlaneseq
        %v751 = vshrl.u32 %v750, 7
        %v752 = vsub.s32 0, %v751
        %v753 = vrot.slane %v748, %v752
        %756 = vset.pattern.permute.xlu0 0
        %757 = vperm.xlu0 %756, %v747
        %v758 = vpop.permute.xlu0 %757
        %v760 = vmul.f32 %v753, %v758
        %v761 = vmul.f32 %v760, 1.442695
        %v762 = vpow.pop %v761
        %764 = vrot.lane.b32.xlu0 %v762, 16
        %v765 = vpop.permute.xlu0 %764
        %vm767 = vcmask 261248
        %768 = vst.msk [vmem:[#allocation3] sm:$0xff] %vm767, %v765
        %v769 = vld [vmem:[%s3] sm:$0xff]
        %v770 = vld [vmem:[%s3 + $0x8] sm:$0xff]
        %v771 = vld [vmem:[%s3 + $0x10] sm:$0xff]
        %v772 = vld [vmem:[%s3 + $0x18] sm:$0xff]
        %v773 = vld [vmem:[%s4] sm:$0x1]
        %v775 = vlaneseq
        %v776 = vshrl.u32 %v775, 7
        %v777 = vsub.s32 0, %v776
        %v778 = vrot.slane %v773, %v777
        %780 = vmatprep.subr.mxu0 0.0
        %781 = vmatpush1.msra.mxu0 %v769
        %782 = vmatprep.subr.mxu0 0.0
        %783 = vmatpush1.msra.mxu0 %v770
        %784 = vmatprep.subr.mxu0 0.0
        %785 = vmatpush1.msra.mxu0 %v771
        %786 = vmatprep.subr.mxu0 0.0
        %787 = vmatpush1.msra.mxu0 %v772
        %788 = vmatprep.subr.mxu0 0.0
        %789 = vmatpush1.msra.mxu0 0.0
        %790 = vmatprep.subr.mxu0 0.0
        %791 = vmatpush1.msra.mxu0 0.0
        %792 = vmatprep.subr.mxu0 0.0
        %793 = vmatpush1.msra.mxu0 0.0
        %794 = vmatprep.subr.mxu0 0.0
        %795 = vmatpush1.msra.mxu0 0.0
        %796 = vmatprep.subr.mxu0 0.0
        %797 = vmatpush1.msra.mxu0 0.0
        %798 = vmatprep.subr.mxu0 0.0
        %799 = vmatpush1.msra.mxu0 0.0
        %800 = vmatprep.subr.mxu0 0.0
        %801 = vmatpush1.msra.mxu0 0.0
        %802 = vmatprep.subr.mxu0 0.0
        %803 = vmatpush1.msra.mxu0 0.0
        %804 = vmatprep.subr.mxu0 0.0
        %805 = vmatpush1.msra.mxu0 0.0
        %806 = vmatprep.subr.mxu0 0.0
        %807 = vmatpush1.msra.mxu0 0.0
        %808 = vmatprep.subr.mxu0 0.0
        %809 = vmatpush1.msra.mxu0 0.0
        %810 = vmatprep.subr.mxu0 0.0
        %811 = vmatpush1.msra.mxu0 0.0
        %812 = vmatprep.subr.mxu0 0.0
        %813 = vmatpush1.msra.mxu0 0.0
        %814 = vmatprep.subr.mxu0 0.0
        %815 = vmatpush1.msra.mxu0 0.0
        %816 = vmatprep.subr.mxu0 0.0
        %817 = vmatpush1.msra.mxu0 0.0
        %818 = vmatprep.subr.mxu0 0.0
        %819 = vmatpush1.msra.mxu0 0.0
        %820 = vmatprep.subr.mxu0 0.0
        %821 = vmatpush1.msra.mxu0 0.0
        %822 = vmatprep.subr.mxu0 0.0
        %823 = vmatpush1.msra.mxu0 0.0
        %824 = vmatprep.subr.mxu0 0.0
        %825 = vmatpush1.msra.mxu0 0.0
        %826 = vmatprep.subr.mxu0 0.0
        %827 = vmatpush1.msra.mxu0 0.0
        %828 = vmatprep.subr.mxu0 0.0
        %829 = vmatpush1.msra.mxu0 0.0
        %830 = vmatprep.subr.mxu0 0.0
        %831 = vmatpush1.msra.mxu0 0.0
        %832 = vmatprep.subr.mxu0 0.0
        %833 = vmatpush1.msra.mxu0 0.0
        %834 = vmatprep.subr.mxu0 0.0
        %835 = vmatpush1.msra.mxu0 0.0
        %836 = vmatprep.subr.mxu0 0.0
        %837 = vmatpush1.msra.mxu0 0.0
        %838 = vmatprep.subr.mxu0 0.0
        %839 = vmatpush1.msra.mxu0 0.0
        %840 = vmatprep.subr.mxu0 0.0
        %841 = vmatpush1.msra.mxu0 0.0
        %842 = vmatprep.subr.mxu0 0.0
        %843 = vmatpush1.msra.mxu0 0.0
        %844 = vmatprep.mubr.f32.mxu0 0.0
        %845 = vmatmul.mubr.f32.gmra.mrb[0].mxu0 %v668
        %v846 = vpop.f32.mrb[0].mxu0
        %v847 = vadd.f32 %v778, %v846
        %v848 = vpop.f32.mrb[0].mxu0
        %849 = vdwg.mxu0
        %851 = vrot.lane.b32.xlu0 %v847, 16
        %v852 = vpop.permute.xlu0 %851
        %854 = vst.msk [vmem:[#allocation4] sm:$0xff] %vm767, %v852
        %v855 = vld [vmem:[%s7] sm:$0xff]
        %v856 = vld [vmem:[%s7 + $0x8] sm:$0xff]
        %v857 = vld [vmem:[%s7 + $0x10] sm:$0xff]
        %v858 = vld [vmem:[%s7 + $0x18] sm:$0xff]
        %v859 = vld [vmem:[%s8] sm:$0x1]
        %v861 = vlaneseq
        %v862 = vshrl.u32 %v861, 7
        %v863 = vsub.s32 0, %v862
        %v864 = vrot.slane %v859, %v863
        %866 = vmatprep.subr.mxu0 0.0
        %867 = vmatpush1.msra.mxu0 %v855
        %868 = vmatprep.subr.mxu0 0.0
        %869 = vmatpush1.msra.mxu0 %v856
        %870 = vmatprep.subr.mxu0 0.0
        %871 = vmatpush1.msra.mxu0 %v857
        %872 = vmatprep.subr.mxu0 0.0
        %873 = vmatpush1.msra.mxu0 %v858
        %874 = vmatprep.subr.mxu0 0.0
        %875 = vmatpush1.msra.mxu0 0.0
        %876 = vmatprep.subr.mxu0 0.0
        %877 = vmatpush1.msra.mxu0 0.0
        %878 = vmatprep.subr.mxu0 0.0
        %879 = vmatpush1.msra.mxu0 0.0
        %880 = vmatprep.subr.mxu0 0.0
        %881 = vmatpush1.msra.mxu0 0.0
        %882 = vmatprep.subr.mxu0 0.0
        %883 = vmatpush1.msra.mxu0 0.0
        %884 = vmatprep.subr.mxu0 0.0
        %885 = vmatpush1.msra.mxu0 0.0
        %886 = vmatprep.subr.mxu0 0.0
        %887 = vmatpush1.msra.mxu0 0.0
        %888 = vmatprep.subr.mxu0 0.0
        %889 = vmatpush1.msra.mxu0 0.0
        %890 = vmatprep.subr.mxu0 0.0
        %891 = vmatpush1.msra.mxu0 0.0
        %892 = vmatprep.subr.mxu0 0.0
        %893 = vmatpush1.msra.mxu0 0.0
        %894 = vmatprep.subr.mxu0 0.0
        %895 = vmatpush1.msra.mxu0 0.0
        %896 = vmatprep.subr.mxu0 0.0
        %897 = vmatpush1.msra.mxu0 0.0
        %898 = vmatprep.subr.mxu0 0.0
        %899 = vmatpush1.msra.mxu0 0.0
        %900 = vmatprep.subr.mxu0 0.0
        %901 = vmatpush1.msra.mxu0 0.0
        %902 = vmatprep.subr.mxu0 0.0
        %903 = vmatpush1.msra.mxu0 0.0
        %904 = vmatprep.subr.mxu0 0.0
        %905 = vmatpush1.msra.mxu0 0.0
        %906 = vmatprep.subr.mxu0 0.0
        %907 = vmatpush1.msra.mxu0 0.0
        %908 = vmatprep.subr.mxu0 0.0
        %909 = vmatpush1.msra.mxu0 0.0
        %910 = vmatprep.subr.mxu0 0.0
        %911 = vmatpush1.msra.mxu0 0.0
        %912 = vmatprep.subr.mxu0 0.0
        %913 = vmatpush1.msra.mxu0 0.0
        %914 = vmatprep.subr.mxu0 0.0
        %915 = vmatpush1.msra.mxu0 0.0
        %916 = vmatprep.subr.mxu0 0.0
        %917 = vmatpush1.msra.mxu0 0.0
        %918 = vmatprep.subr.mxu0 0.0
        %919 = vmatpush1.msra.mxu0 0.0
        %920 = vmatprep.subr.mxu0 0.0
        %921 = vmatpush1.msra.mxu0 0.0
        %922 = vmatprep.subr.mxu0 0.0
        %923 = vmatpush1.msra.mxu0 0.0
        %924 = vmatprep.subr.mxu0 0.0
        %925 = vmatpush1.msra.mxu0 0.0
        %926 = vmatprep.subr.mxu0 0.0
        %927 = vmatpush1.msra.mxu0 0.0
        %928 = vmatprep.subr.mxu0 0.0
        %929 = vmatpush1.msra.mxu0 0.0
        %930 = vmatprep.mubr.f32.mxu0 0.0
        %931 = vmatmul.mubr.f32.gmra.mrb[0].mxu0 %v668
        %v932 = vpop.f32.mrb[0].mxu0
        %v933 = vadd.f32 %v864, %v932
        %v934 = vpop.f32.mrb[0].mxu0
        %935 = vdwg.mxu0
        %s936 = scalar_lea.vmem %s370, 8 [#allocation10]
        %937 = vst.msk [vmem:[%s936] sm:$0xff] %vm391, %v933
        %v938 = vld [vmem:[#allocation2] sm:$0x1]
        %v939 = vld [vmem:[#allocation3] sm:$0xff]
        %v940 = vld [vmem:[#allocation4] sm:$0xff]
        %v941 = vmul.f32 %v939, %v938
        %v942 = vadd.f32 %v941, %v940
        %v944 = vrot.slane %v942, 7
        %v946 = vmul.f32 %v939, %v944
        %v947 = vadd.f32 %v946, %v940
        %v949 = vrot.slane %v947, 7
        %v951 = vmul.f32 %v939, %v949
        %v952 = vadd.f32 %v951, %v940
        %v954 = vrot.slane %v952, 7
        %v956 = vmul.f32 %v939, %v954
        %v957 = vadd.f32 %v956, %v940
        %v959 = vrot.slane %v957, 7
        %v961 = vmul.f32 %v939, %v959
        %v962 = vadd.f32 %v961, %v940
        %v964 = vrot.slane %v962, 7
        %v966 = vmul.f32 %v939, %v964
        %v967 = vadd.f32 %v966, %v940
        %v969 = vrot.slane %v967, 7
        %v971 = vmul.f32 %v939, %v969
        %v972 = vadd.f32 %v971, %v940
        %v974 = vrot.slane %v972, 7
        %v976 = vmul.f32 %v939, %v974
        %v977 = vadd.f32 %v976, %v940
        %vm978 = vcmask 1040384
        %v979 = vsel %vm978, %v942, %v947
        %vm980 = vcmask 1041408
        %v981 = vsel %vm980, %v979, %v952
        %vm982 = vcmask 1042432
        %v983 = vsel %vm982, %v981, %v957
        %vm984 = vcmask 1043456
        %v985 = vsel %vm984, %v983, %v962
        %vm986 = vcmask 1044480
        %v987 = vsel %vm986, %v985, %v967
        %vm988 = vcmask 1045504
        %v989 = vsel %vm988, %v987, %v972
        %vm990 = vcmask 1046528
        %v991 = vsel %vm990, %v989, %v977
        %992 = vst.msk [vmem:[#allocation5] sm:$0xff] %vm391, %v991
        %vm993 = vcmask 261127
        %994 = vst.msk [vmem:[#allocation2 - $0x7] sm:$0x80] %vm993, %v977
        %v995 = vld [vmem:[#allocation5] sm:$0xff]
        %v996 = vld [vmem:[%s6] sm:$0xff]
        %v997 = vld [vmem:[%s6 + $0x8] sm:$0xff]
        %v999 = vsel %vm488, %v995, 0
        %1001 = vmatprep.subr.mxu0 0.0
        %1002 = vmatpush1.msra.mxu0 %v996
        %1003 = vmatprep.subr.mxu0 0.0
        %1004 = vmatpush1.msra.mxu0 %v997
        %1005 = vmatprep.subr.mxu0 0.0
        %1006 = vmatpush1.msra.mxu0 0.0
        %1007 = vmatprep.subr.mxu0 0.0
        %1008 = vmatpush1.msra.mxu0 0.0
        %1009 = vmatprep.subr.mxu0 0.0
        %1010 = vmatpush1.msra.mxu0 0.0
        %1011 = vmatprep.subr.mxu0 0.0
        %1012 = vmatpush1.msra.mxu0 0.0
        %1013 = vmatprep.subr.mxu0 0.0
        %1014 = vmatpush1.msra.mxu0 0.0
        %1015 = vmatprep.subr.mxu0 0.0
        %1016 = vmatpush1.msra.mxu0 0.0
        %1017 = vmatprep.subr.mxu0 0.0
        %1018 = vmatpush1.msra.mxu0 0.0
        %1019 = vmatprep.subr.mxu0 0.0
        %1020 = vmatpush1.msra.mxu0 0.0
        %1021 = vmatprep.subr.mxu0 0.0
        %1022 = vmatpush1.msra.mxu0 0.0
        %1023 = vmatprep.subr.mxu0 0.0
        %1024 = vmatpush1.msra.mxu0 0.0
        %1025 = vmatprep.subr.mxu0 0.0
        %1026 = vmatpush1.msra.mxu0 0.0
        %1027 = vmatprep.subr.mxu0 0.0
        %1028 = vmatpush1.msra.mxu0 0.0
        %1029 = vmatprep.subr.mxu0 0.0
        %1030 = vmatpush1.msra.mxu0 0.0
        %1031 = vmatprep.subr.mxu0 0.0
        %1032 = vmatpush1.msra.mxu0 0.0
        %1033 = vmatprep.subr.mxu0 0.0
        %1034 = vmatpush1.msra.mxu0 0.0
        %1035 = vmatprep.subr.mxu0 0.0
        %1036 = vmatpush1.msra.mxu0 0.0
        %1037 = vmatprep.subr.mxu0 0.0
        %1038 = vmatpush1.msra.mxu0 0.0
        %1039 = vmatprep.subr.mxu0 0.0
        %1040 = vmatpush1.msra.mxu0 0.0
        %1041 = vmatprep.subr.mxu0 0.0
        %1042 = vmatpush1.msra.mxu0 0.0
        %1043 = vmatprep.subr.mxu0 0.0
        %1044 = vmatpush1.msra.mxu0 0.0
        %1045 = vmatprep.subr.mxu0 0.0
        %1046 = vmatpush1.msra.mxu0 0.0
        %1047 = vmatprep.subr.mxu0 0.0
        %1048 = vmatpush1.msra.mxu0 0.0
        %1049 = vmatprep.subr.mxu0 0.0
        %1050 = vmatpush1.msra.mxu0 0.0
        %1051 = vmatprep.subr.mxu0 0.0
        %1052 = vmatpush1.msra.mxu0 0.0
        %1053 = vmatprep.subr.mxu0 0.0
        %1054 = vmatpush1.msra.mxu0 0.0
        %1055 = vmatprep.subr.mxu0 0.0
        %1056 = vmatpush1.msra.mxu0 0.0
        %1057 = vmatprep.subr.mxu0 0.0
        %1058 = vmatpush1.msra.mxu0 0.0
        %1059 = vmatprep.subr.mxu0 0.0
        %1060 = vmatpush1.msra.mxu0 0.0
        %1061 = vmatprep.subr.mxu0 0.0
        %1062 = vmatpush1.msra.mxu0 0.0
        %1063 = vmatprep.subr.mxu0 0.0
        %1064 = vmatpush1.msra.mxu0 0.0
        %1065 = vmatprep.mubr.f32.mxu0 0.0
        %1066 = vmatmul.mubr.f32.gmra.mrb[0].mxu0 %v999
        %v1067 = vpop.f32.mrb[0].mxu0
        %v1068 = vadd.f32 0.0, %v1067
        %v1069 = vpop.f32.mrb[0].mxu0
        %1070 = vdwg.mxu0
        %v1071 = vld [vmem:[%s370] sm:$0xff]
        %v1072 = vadd.f32 %v1071, %v1068
        %1073 = vst.msk [vmem:[%s370] sm:$0xff] %vm391, %v1072
        %v1074 = vld [vmem:[#allocation5] sm:$0xff]
        %v1075 = vld [vmem:[%s6] sm:$0xff]
        %v1076 = vld [vmem:[%s6 + $0x8] sm:$0xff]
        %1078 = vrot.lane.b32.xlu0 %v1074, 112
        %v1079 = vpop.permute.xlu0 %1078
        %v1080 = vsel %vm488, %v1079, 0
        %1082 = vmatprep.subr.mxu0 0.0
        %1083 = vmatpush1.msra.mxu0 %v1075
        %1084 = vmatprep.subr.mxu0 0.0
        %1085 = vmatpush1.msra.mxu0 %v1076
        %1086 = vmatprep.subr.mxu0 0.0
        %1087 = vmatpush1.msra.mxu0 0.0
        %1088 = vmatprep.subr.mxu0 0.0
        %1089 = vmatpush1.msra.mxu0 0.0
        %1090 = vmatprep.subr.mxu0 0.0
        %1091 = vmatpush1.msra.mxu0 0.0
        %1092 = vmatprep.subr.mxu0 0.0
        %1093 = vmatpush1.msra.mxu0 0.0
        %1094 = vmatprep.subr.mxu0 0.0
        %1095 = vmatpush1.msra.mxu0 0.0
        %1096 = vmatprep.subr.mxu0 0.0
        %1097 = vmatpush1.msra.mxu0 0.0
        %1098 = vmatprep.subr.mxu0 0.0
        %1099 = vmatpush1.msra.mxu0 0.0
        %1100 = vmatprep.subr.mxu0 0.0
        %1101 = vmatpush1.msra.mxu0 0.0
        %1102 = vmatprep.subr.mxu0 0.0
        %1103 = vmatpush1.msra.mxu0 0.0
        %1104 = vmatprep.subr.mxu0 0.0
        %1105 = vmatpush1.msra.mxu0 0.0
        %1106 = vmatprep.subr.mxu0 0.0
        %1107 = vmatpush1.msra.mxu0 0.0
        %1108 = vmatprep.subr.mxu0 0.0
        %1109 = vmatpush1.msra.mxu0 0.0
        %1110 = vmatprep.subr.mxu0 0.0
        %1111 = vmatpush1.msra.mxu0 0.0
        %1112 = vmatprep.subr.mxu0 0.0
        %1113 = vmatpush1.msra.mxu0 0.0
        %1114 = vmatprep.subr.mxu0 0.0
        %1115 = vmatpush1.msra.mxu0 0.0
        %1116 = vmatprep.subr.mxu0 0.0
        %1117 = vmatpush1.msra.mxu0 0.0
        %1118 = vmatprep.subr.mxu0 0.0
        %1119 = vmatpush1.msra.mxu0 0.0
        %1120 = vmatprep.subr.mxu0 0.0
        %1121 = vmatpush1.msra.mxu0 0.0
        %1122 = vmatprep.subr.mxu0 0.0
        %1123 = vmatpush1.msra.mxu0 0.0
        %1124 = vmatprep.subr.mxu0 0.0
        %1125 = vmatpush1.msra.mxu0 0.0
        %1126 = vmatprep.subr.mxu0 0.0
        %1127 = vmatpush1.msra.mxu0 0.0
        %1128 = vmatprep.subr.mxu0 0.0
        %1129 = vmatpush1.msra.mxu0 0.0
        %1130 = vmatprep.subr.mxu0 0.0
        %1131 = vmatpush1.msra.mxu0 0.0
        %1132 = vmatprep.subr.mxu0 0.0
        %1133 = vmatpush1.msra.mxu0 0.0
        %1134 = vmatprep.subr.mxu0 0.0
        %1135 = vmatpush1.msra.mxu0 0.0
        %1136 = vmatprep.subr.mxu0 0.0
        %1137 = vmatpush1.msra.mxu0 0.0
        %1138 = vmatprep.subr.mxu0 0.0
        %1139 = vmatpush1.msra.mxu0 0.0
        %1140 = vmatprep.subr.mxu0 0.0
        %1141 = vmatpush1.msra.mxu0 0.0
        %1142 = vmatprep.subr.mxu0 0.0
        %1143 = vmatpush1.msra.mxu0 0.0
        %1144 = vmatprep.subr.mxu0 0.0
        %1145 = vmatpush1.msra.mxu0 0.0
        %1146 = vmatprep.mubr.f32.mxu0 0.0
        %1147 = vmatmul.mubr.f32.gmra.mrb[0].mxu0 %v1080
        %v1148 = vpop.f32.mrb[0].mxu0
        %v1149 = vadd.f32 0.0, %v1148
        %v1150 = vpop.f32.mrb[0].mxu0
        %1151 = vdwg.mxu0
        %v1152 = vld [vmem:[%s936] sm:$0xff]
        %v1153 = vadd.f32 %v1152, %v1149
        %1154 = vst.msk [vmem:[%s936] sm:$0xff] %vm391, %v1153
        %s1155 = sand.u32 %s246, 1
        %s1156 = scalar_lea.sflag [#allocation9], %s1155
        %s1157 = sand.u32 %s246, 1
        %s1158 = smul.addr %s1157, 16
        %s1159 = scalar_lea.vmem [#allocation10], %s1158
        // Predicated region
        $region65: #{tpu_custom_call.1} parent=55 // pred_check
          %p1160 = pneg %p256
        $region66: #{tpu_custom_call.1} parent=55 // pred_check_branch
          %1162 = sbr.rel (%p1160) target = $region68
        $region67: #{tpu_custom_call.1} parent=55 // pred_region
          %s1163 = smul.u32 2, %s32
          %s1165 = ssub.s32 256, 256
          %1166 = vsyncadd %s1156, %s1165
          %s1167 = smul.addr %s1163, 3
          %s1168 = sadd.s32 %s33, %s1167
          %s1169 = smul.addr %s1168, 128
          %s1170 = scalar_lea.hbm %s9, %s1169
          %s1171 = sshll.u32 %s1159, 4
          %s1172 = int_to_ptr.vmem [resolvable:$true] %s1171
          %1177 = dma.vmem_to_hbm [thread:$0]  %s1172, 256, %s1170, %s1156, 128, 384, 8
        $region68: #{tpu_custom_call.1} parent=55 // pred_fallthru
          _
      $region56: #{tpu_custom_call.1} parent=5 // pred_fallthru
        _
      %p1178 = scmp.le.s32.totalorder 2, %s23
      // Predicated region
      $region69: #{tpu_custom_call.1} parent=5 // pred_check
        %p1179 = pneg %p1178
      $region70: #{tpu_custom_call.1} parent=5 // pred_check_branch
        %1181 = sbr.rel (%p1179) target = $region72
      $region71: #{tpu_custom_call.1} parent=5 // pred_region
        %s1182 = ssub.s32 %s23, 2
        // Predicated region
        $region73: #{tpu_custom_call.1} parent=71 // pred_check
          %p1183 = pneg %p262
        $region74: #{tpu_custom_call.1} parent=71 // pred_check_branch
          %1185 = sbr.rel (%p1183) target = $region76
        $region75: #{tpu_custom_call.1} parent=71 // pred_region
          %s1186 = sand.u32 %s247, 1
          %s1187 = scalar_lea.sflag [#allocation9], %s1186
          %s1188 = sand.u32 %s247, 1
          %s1189 = smul.addr %s1188, 16
          %s1190 = scalar_lea.vmem [#allocation10], %s1189
          %1191 = dma.done %s1187, 256
        $region76: #{tpu_custom_call.1} parent=71 // pred_fallthru
          _
      $region72: #{tpu_custom_call.1} parent=5 // pred_fallthru
        _
    $region6: #{tpu_custom_call.1} parent=1 // loop_footer
      %s27 = sadd.s32 1, %s23
    $region7: #{tpu_custom_call.1} parent=1 // loop_footer_branch
      %22 = sbr.rel target = $region3
    $region8: #{tpu_custom_call.1} parent=1 // loop_exit
      _
    %1192 = vsyncpa [#allocation8], 1
    %s1193 = scalar_lea.sflag [#allocation8], 1
    %1194 = vsyncpa %s1193, 1
    %1195 = vsyncpa [#allocation9], 1
    %s1196 = scalar_lea.sflag [#allocation9], 1
    %1197 = vsyncpa %s1196, 1

</llo_original>
